<compile_context>
chip_gen: v5e
topology: v5e:2x2
jax: 0.10.0
libtpu: 0.0.40
codegen_flags: <defaults>
</compile_context>

<pallas_src>
import functools

import jax
import jax.numpy as jnp
from jax import lax
from jax.experimental import pallas as pl
from jax.experimental.pallas import tpu as pltpu


def _round_up(x, m):
    return (x + m - 1) // m * m


# -----------------------------------------------------------------------------
# Kernel: one grid step = one direction (axis 0) x one T-chunk (axis 1).
# -----------------------------------------------------------------------------
def _bigru_kernel(x_ref, wih_ref, whh_ref, ball_ref, bhn_ref,
                  out_ref, hfin_ref,
                  gi_ref, yc_ref, h_ref,
                  *, seq_len, chunk, hidden_p, unroll):
    """
    x_ref   : (B, C, D)    input chunk (compute dtype), streamed/double-buffered
    wih_ref : (D, 3Hp)     input-projection weights for this direction
    whh_ref : (Hp, 3Hp)    recurrent weights (gate-major, lane-padded, [r|z|n])
    ball_ref: (1, 3Hp)     b_ih + [b_hr | b_hz | 0]   (f32)
    bhn_ref : (1, Hp)      b_hn                        (f32)
    out_ref : (B, C, Hp)   this direction's lane slice of the (B,T,2Hp) output
    hfin_ref: (B, Hp)      final hidden state for this direction
    gi_ref  : VMEM (C, B, 3Hp) f32   hoisted input projections (time-major)
    yc_ref  : VMEM (C, B, Hp)  f32   chunk outputs (time-major)
    h_ref   : VMEM (B, Hp)     f32   hidden state carried across chunks
    """
    d = pl.program_id(0)          # 0 = forward, 1 = backward
    c = pl.program_id(1)          # chunk step within this direction's sweep
    nchunks = pl.num_programs(1)
    B, C, D = x_ref.shape
    Hp = hidden_p
    cdt = whh_ref.dtype           # compute dtype (f32 or bf16), set in wrapper

    # Reset hidden state at the start of each direction's sweep over T.
    @pl.when(c == 0)
    def _init():
        h_ref[...] = jnp.zeros_like(h_ref)

    # ---- Hoisted input projection: ONE (B*C, D) @ (D, 3Hp) MXU matmul.
    #      (B, C, D) -> (B*C, D) is layout-free because C % 8 == 0.
    x2 = x_ref[...].reshape(B * C, D)
    gi = jnp.dot(x2, wih_ref[...], preferred_element_type=jnp.float32)
    gi = gi + ball_ref[...]                               # b_ih + b_hr/b_hz folded
    # Scatter to time-major (C, B, 3Hp) with B static strided copies (off the
    # serial path); the recurrence then uses only leading-axis dynamic indexing.
    for b in range(B):
        gi_ref[:, b, :] = gi[b * C:(b + 1) * C, :]

    whh = whh_ref[...]                                    # (Hp, 3Hp), compute dtype
    # Hoist the remaining recurrent bias off the serial path (broadcast once).
    bhn = jnp.broadcast_to(bhn_ref[...], (B, Hp))

    # Global timestep of row 0 of this chunk (fwd: c, bwd: nchunks-1-c).
    tblock = c + d * (nchunks - 1 - 2 * c)
    t0 = tblock * C
    ragged = (seq_len % C) != 0                           # Python-static

    def step(i, h):
        # Forward walks rows 0..C-1; backward walks rows C-1..0 (tail -> head).
        row = i + d * (C - 1 - 2 * i)
        gi_t = gi_ref[row]                                              # (B, 3Hp)
        # Only this small matmul (optionally bf16, f32 accumulation) stays on
        # the serial critical path.
        gh = jnp.dot(h.astype(cdt), whh,
                     preferred_element_type=jnp.float32)                # (B, 3Hp)
        # Gate slices are lane-aligned because Hp % 128 == 0.
        r = jax.nn.sigmoid(gi_t[:, 0:Hp] + gh[:, 0:Hp])
        z = jax.nn.sigmoid(gi_t[:, Hp:2 * Hp] + gh[:, Hp:2 * Hp])
        n = jnp.tanh(gi_t[:, 2 * Hp:3 * Hp] + r * (gh[:, 2 * Hp:3 * Hp] + bhn))
        h_new = (1.0 - z) * n + z * h
        if ragged:
            # Padded timesteps (t >= seq_len) must not advance the recurrence.
            h_new = jnp.where(t0 + row < seq_len, h_new, h)
        yc_ref[row] = h_new
        return h_new

    h = lax.fori_loop(0, C, step, h_ref[...], unroll=unroll)
    h_ref[...] = h            # carry across this direction's chunks
    hfin_ref[...] = h         # last chunk's write is the direction's final h

    # ---- Chunk epilogue: time-major VMEM scratch -> batch-major, lane-dense
    #      output block (replaces the former wrapper transpose / extra HBM pass).
    for b in range(B):
        out_ref[b] = yc_ref[:, b, :]


# -----------------------------------------------------------------------------
# Static (Python-level) config: chunk, unroll, VMEM limit per TPU generation.
# -----------------------------------------------------------------------------
def _pick_config(B, T, D, H, chunk, compute_dtype):
    Hp = _round_up(H, 128)
    T8 = _round_up(max(T, 1), 8)
    try:
        info = pltpu.get_tpu_info()
        cap = int(getattr(info, "vmem_capacity_bytes", 0)) or (64 << 20)
    except Exception:                       # API change / not a TPU: be conservative
        cap = 64 << 20
    cap = min(max(cap, 32 << 20), 128 << 20)
    vmem_limit = (cap * 3) // 4             # ~96 MiB on v5e/v6e, ~48 MiB on v7x

    cbytes = jnp.dtype(compute_dtype).itemsize
    Bp = _round_up(B, 8)                    # sublane padding of the B dim
    fixed = (2 * (D * 3 * Hp + Hp * 3 * Hp) * cbytes   # double-buffered weights
             + 2 * 4 * 3 * Hp * 4                      # biases
             + 3 * Bp * Hp * 4                         # h scratch + hfin buffers
             + (2 << 20))                              # slack
    per_c = (2 * Bp * D * cbytes          # x blocks (double-buffered)
             + 2 * Bp * Hp * 4            # out blocks (double-buffered)
             + Bp * 3 * Hp * 4            # gi scratch
             + Bp * Hp * 4)               # chunk-output scratch
    if chunk is None:
        budget = max(vmem_limit - fixed, 8 * per_c)
        chunk = min(budget // per_c, 512, T8)
    chunk = int(max(8, _round_up(min(int(chunk), T8), 8)))

    # fori_loop unroll: more overlap room when the per-step live set is small,
    # less when B*3Hp starts to pressure the 64-vreg register file.
    step_bytes = B * 3 * Hp * 4
    if step_bytes <= 16 * 1024:
        unroll = 8
    elif step_bytes <= 48 * 1024:
        unroll = 4
    elif step_bytes <= 96 * 1024:
        unroll = 2
    else:
        unroll = 1
    unroll = max(1, min(unroll, chunk))
    return chunk, unroll, int(vmem_limit)


def _pad_gates(w, H, Hp):
    """Pad each gate of a (..., 3H) array to Hp lanes -> (..., 3Hp)."""
    if Hp == H:
        return w
    pad = [(0, 0)] * (w.ndim - 1) + [(0, Hp - H)]
    return jnp.concatenate(
        [jnp.pad(w[..., g * H:(g + 1) * H], pad) for g in range(3)], axis=-1)


# -----------------------------------------------------------------------------
# Jitted implementation (param prep is fused into the jit).
# -----------------------------------------------------------------------------
@functools.partial(
    jax.jit,
    static_argnames=("chunk", "compute_dtype", "unroll", "vmem_limit_bytes"))
def _encoder_impl(x, wih, whh, bih, bhh, *, chunk, compute_dtype, unroll,
                  vmem_limit_bytes):
    B, T, D = x.shape
    H = whh.shape[1]
    Hp = _round_up(H, 128)
    C = chunk
    nchunks = pl.cdiv(T, C)
    T_pad = nchunks * C

    # ---- one-time parameter prep: gate-major lane padding, recurrent-bias
    #      folding (b_hr/b_hz into the projection bias), cast to compute dtype.
    wih_p = _pad_gates(wih, H, Hp).astype(compute_dtype)               # (2, D, 3Hp)
    whh_p = _pad_gates(whh, H, Hp)                                     # (2, H, 3Hp)
    whh_p = jnp.pad(whh_p, ((0, 0), (0, Hp - H), (0, 0))).astype(compute_dtype)
    b_all = bih + jnp.concatenate(
        [bhh[..., :2 * H], jnp.zeros_like(bhh[..., 2 * H:])], axis=-1)
    b_all = _pad_gates(b_all, H, Hp)                                   # (2, 1, 3Hp)
    b_hn = jnp.pad(bhh[..., 2 * H:], ((0, 0), (0, 0), (0, Hp - H)))    # (2, 1, Hp)

    x_c = x.astype(compute_dtype)
    if T_pad != T:
        x_c = jnp.pad(x_c, ((0, 0), (0, T_pad - T), (0, 0)))

    def t_idx(d, c):
        # forward: chunk c ; backward: chunk nchunks-1-c (walks T from the tail)
        return c + d * (nchunks - 1 - 2 * c)

    kernel = functools.partial(
        _bigru_kernel, seq_len=T, chunk=C, hidden_p=Hp, unroll=unroll)

    out, hfin = pl.pallas_call(
        kernel,
        out_shape=(
            jax.ShapeDtypeStruct((B, T_pad, 2 * Hp), jnp.float32),  # fused output
            jax.ShapeDtypeStruct((2, B, Hp), jnp.float32),          # final h per dir
        ),
        grid_spec=pltpu.PrefetchScalarGridSpec(
            num_scalar_prefetch=0,
            grid=(2, nchunks),
            in_specs=[
                pl.BlockSpec((B, C, D), lambda d, c: (0, t_idx(d, c), 0)),  # x chunk
                pl.BlockSpec((None, D, 3 * Hp), lambda d, c: (d, 0, 0)),    # wih[d]
                pl.BlockSpec((None, Hp, 3 * Hp), lambda d, c: (d, 0, 0)),   # whh[d]
                pl.BlockSpec((None, 1, 3 * Hp), lambda d, c: (d, 0, 0)),    # b_all[d]
                pl.BlockSpec((None, 1, Hp), lambda d, c: (d, 0, 0)),        # b_hn[d]
            ],
            out_specs=(
                # Final layout written directly: lane offset d*Hp within 2*Hp.
                pl.BlockSpec((B, C, Hp), lambda d, c: (0, t_idx(d, c), d)),
                pl.BlockSpec((None, B, Hp), lambda d, c: (d, 0, 0)),
            ),
            scratch_shapes=[
                pltpu.VMEM((C, B, 3 * Hp), jnp.float32),   # gi (time-major)
                pltpu.VMEM((C, B, Hp), jnp.float32),       # chunk outputs
                pltpu.VMEM((B, Hp), jnp.float32),          # hidden-state carry
            ],
        ),
        compiler_params=pltpu.CompilerParams(
            # Direction axis is data-parallel (v7x: one direction per TC);
            # the chunk axis carries the recurrence -> arbitrary.
            dimension_semantics=("parallel", "arbitrary"),
            vmem_limit_bytes=vmem_limit_bytes,
        ),
    )(x_c, wih_p, whh_p, b_all, b_hn)

    # ---- final views: no transpose; lane slicing only when H % 128 != 0 ----
    out = out[:, :T, :]
    if Hp == H:
        output = out                                        # already (B, T, 2H)
        final = hfin
    else:
        output = jnp.concatenate([out[..., :H], out[..., Hp:Hp + H]], axis=-1)
        final = hfin[..., :H]
    # PyTorch: final (2, B, H) -> cat(fwd, bwd, dim=2) -> (1, B, 2H)
    final = jnp.transpose(final, (1, 0, 2)).reshape(B, 2 * H)[None, :, :]
    return output, final


# -----------------------------------------------------------------------------
# Public wrapper
# -----------------------------------------------------------------------------
def encoder_forward(x, params, mask=None, lengths=None, *,
                    chunk=None, compute_dtype=jnp.float32, unroll=None):
    """Bidirectional GRU encoder forward.

    x: [B, T, D] float32 (batch_first, like the PyTorch module).
    mask / lengths accepted for signature parity but ignored (the reference
    PyTorch forward does not pack the sequence either).
    compute_dtype=jnp.bfloat16 runs both the input projection and the
    recurrent matmul in bf16 (f32 accumulation; gates/hidden state stay f32).
    Returns (output [B, T, 2H], final [1, B, 2H]).
    """
    del mask, lengths
    B, T, D = x.shape
    H = params["whh"].shape[1]
    C, auto_unroll, vmem_limit = _pick_config(B, T, D, H, chunk, compute_dtype)
    if unroll is None:
        unroll = auto_unroll
    return _encoder_impl(x, params["wih"], params["whh"], params["bih"],
                         params["bhh"], chunk=C, compute_dtype=compute_dtype,
                         unroll=int(unroll), vmem_limit_bytes=vmem_limit)


# -----------------------------------------------------------------------------
# Pure-JAX reference (lax.scan) for correctness checks.
# -----------------------------------------------------------------------------
def _ref_gru_dir(x_tbd, wih, whh, bih, bhh, H):
    def cell(h, x_t):
        gi = x_t @ wih + bih
        gh = h @ whh + bhh
        r = jax.nn.sigmoid(gi[:, 0:H] + gh[:, 0:H])
        z = jax.nn.sigmoid(gi[:, H:2 * H] + gh[:, H:2 * H])
        n = jnp.tanh(gi[:, 2 * H:3 * H] + r * gh[:, 2 * H:3 * H])
        h = (1.0 - z) * n + z * h
        return h, h

    B = x_tbd.shape[1]
    h0 = jnp.zeros((B, H), jnp.float32)
    h_last, outs = lax.scan(cell, h0, x_tbd)
    return outs, h_last


def encoder_reference(x, params):
    B, T, D = x.shape
    H = params["whh"].shape[1]
    x_tbd = jnp.transpose(x, (1, 0, 2))
    out_f, hf = _ref_gru_dir(x_tbd, params["wih"][0], params["whh"][0],
                             params["bih"][0], params["bhh"][0], H)
    out_b_rev, hb = _ref_gru_dir(x_tbd[::-1], params["wih"][1], params["whh"][1],
                                 params["bih"][1], params["bhh"][1], H)
    out_b = out_b_rev[::-1]
    output = jnp.transpose(jnp.concatenate([out_f, out_b], axis=-1), (1, 0, 2))
    final = jnp.concatenate([hf, hb], axis=-1)[None, :, :]
    return output, final


# -----------------------------------------------------------------------------
# Parameter init (PyTorch nn.GRU default: U(-1/sqrt(H), 1/sqrt(H))).
# Layout: directions stacked on a leading axis, weights pre-transposed,
# PyTorch gate order [r | z | n] along the last axis:
#   wih (2, D, 3H) == stack([W_ih_l0.T, W_ih_l0_reverse.T]), etc.
# -----------------------------------------------------------------------------
def init_params(key, input_size, hidden_size):
    H, D = hidden_size, input_size
    bound = 1.0 / float(H) ** 0.5
    keys = jax.random.split(key, 8)

    def u(kk, shape):
        return jax.random.uniform(kk, shape, jnp.float32, -bound, bound)

    return {
        "wih": jnp.stack([u(keys[0], (D, 3 * H)), u(keys[4], (D, 3 * H))]),
        "whh": jnp.stack([u(keys[1], (H, 3 * H)), u(keys[5], (H, 3 * H))]),
        "bih": jnp.stack([u(keys[2], (1, 3 * H)), u(keys[6], (1, 3 * H))]),
        "bhh": jnp.stack([u(keys[3], (1, 3 * H)), u(keys[7], (1, 3 * H))]),
    }


if __name__ == "__main__":
    def run_case(key, B, T, D, H, chunk, compute_dtype, atol, rtol):
        kx, kp = jax.random.split(key)
        x = jax.random.normal(kx, (B, T, D), jnp.float32)
        params = init_params(kp, D, H)
        mask = jnp.ones((B, 1, T), jnp.bool_)      # unused (as in PyTorch forward)
        lengths = jnp.full((B,), T, jnp.int32)     # unused
        output, final = encoder_forward(x, params, mask, lengths,
                                        chunk=chunk, compute_dtype=compute_dtype)
        jax.block_until_ready((output, final))
        ref_output, ref_final = encoder_reference(x, params)
        assert output.shape == (B, T, 2 * H)
        assert final.shape == (1, B, 2 * H)
        assert jnp.allclose(output, ref_output, atol=atol, rtol=rtol), \
            f"output mismatch: {jnp.max(jnp.abs(output - ref_output))}"
        assert jnp.allclose(final, ref_final, atol=atol, rtol=rtol), \
            f"final mismatch: {jnp.max(jnp.abs(final - ref_final))}"

    key = jax.random.PRNGKey(0)
    k1, k2, k3, k4, k5 = jax.random.split(key, 5)

    # 1) primary small shapes, single chunk, f32
    run_case(k1, B=2, T=8, D=16, H=32, chunk=128, compute_dtype=jnp.float32,
             atol=1e-4, rtol=1e-4)
    # 2) multi-chunk streaming (hidden-state carry across grid steps, reverse
    #    chunk order for the backward direction)
    run_case(k2, B=2, T=16, D=16, H=32, chunk=8, compute_dtype=jnp.float32,
             atol=1e-4, rtol=1e-4)
    # 3) ragged T (padded + masked last chunk)
    run_case(k3, B=2, T=12, D=16, H=32, chunk=8, compute_dtype=jnp.float32,
             atol=1e-4, rtol=1e-4)
    # 4) lane-aligned H (H % 128 == 0): no wrapper slicing, auto chunk/VMEM
    run_case(k4, B=2, T=16, D=32, H=128, chunk=None, compute_dtype=jnp.float32,
             atol=1e-4, rtol=1e-4)
    # 5) bf16 projection + bf16 recurrent matmul (f32 accumulation/gates/state)
    run_case(k5, B=2, T=8, D=16, H=32, chunk=None, compute_dtype=jnp.bfloat16,
             atol=5e-2, rtol=5e-2)

    print("KERNEL_OK")
</pallas_src>

<mosaic_0001>
module attributes {stable_mosaic.version = 11 : i64} {
  func.func @_bigru_kernel(%arg0: i32, %arg1: i32, %arg2: memref<2x8x16xf32, #tpu.memory_space<vmem>>, %arg3: memref<1x16x384xf32, #tpu.memory_space<vmem>>, %arg4: memref<1x128x384xf32, #tpu.memory_space<vmem>>, %arg5: memref<1x1x384xf32, #tpu.memory_space<vmem>>, %arg6: memref<1x1x128xf32, #tpu.memory_space<vmem>>, %arg7: memref<2x8x128xf32, #tpu.memory_space<vmem>>, %arg8: memref<1x2x128xf32, #tpu.memory_space<vmem>>, %arg9: memref<8x2x384xf32, #tpu.memory_space<vmem>>, %arg10: memref<8x2x128xf32, #tpu.memory_space<vmem>>, %arg11: memref<2x128xf32, #tpu.memory_space<vmem>>) attributes {dimension_semantics = [#tpu.dimension_semantics<parallel>, #tpu.dimension_semantics<arbitrary>], iteration_bounds = array<i64: 2, 1>, scalar_prefetch = 0 : i64, scratch_operands = 3 : i64, tpu.core_type = #tpu.core_type<tc>, window_params = [{transform_indices = @transform_0, window_bounds = array<i64: 2, 8, 16>}, {transform_indices = @transform_1, window_bounds = array<i64: 1, 16, 384>}, {transform_indices = @transform_2, window_bounds = array<i64: 1, 128, 384>}, {transform_indices = @transform_3, window_bounds = array<i64: 1, 1, 384>}, {transform_indices = @transform_4, window_bounds = array<i64: 1, 1, 128>}, {transform_indices = @transform_5, window_bounds = array<i64: 2, 8, 128>}, {transform_indices = @transform_6, window_bounds = array<i64: 1, 2, 128>}]} {
    %c0_i32 = arith.constant 0 : i32
    %0 = arith.cmpi eq, %arg1, %c0_i32 : i32
    %1 = arith.extui %0 : i1 to i32
    %c0_i32_0 = arith.constant 0 : i32
    %2 = arith.cmpi ne, %1, %c0_i32_0 : i32
    scf.if %2 {
      %cst_120 = arith.constant 0.000000e+00 : f32
      %353 = vector.broadcast %cst_120 : f32 to vector<2x128xf32>
      %c0_121 = arith.constant 0 : index
      %c0_122 = arith.constant 0 : index
      %354 = vector.load %arg11[%c0_121, %c0_122] : memref<2x128xf32, #tpu.memory_space<vmem>>, vector<2x128xf32>
      tpu.vector_store %arg11[%c0_121, %c0_122], %353 {strides = array<i32>} : memref<2x128xf32, #tpu.memory_space<vmem>>, vector<2x128xf32>,
    } else {
    }
    %c0 = arith.constant 0 : index
    %c0_1 = arith.constant 0 : index
    %c0_2 = arith.constant 0 : index
    %3 = vector.load %arg2[%c0, %c0_1, %c0_2] : memref<2x8x16xf32, #tpu.memory_space<vmem>>, vector<2x8x16xf32>
    %4 = vector.shape_cast %3 : vector<2x8x16xf32> to vector<16x16xf32>
    %c0_3 = arith.constant 0 : index
    %c0_4 = arith.constant 0 : index
    %c0_5 = arith.constant 0 : index
    %5 = vector.load %arg3[%c0_3, %c0_4, %c0_5] : memref<1x16x384xf32, #tpu.memory_space<vmem>>, vector<1x16x384xf32>
    %6 = vector.shape_cast %5 : vector<1x16x384xf32> to vector<16x384xf32>
    %cst = arith.constant dense<0.000000e+00> : vector<16x384xf32>
    %7 = tpu.matmul %4, %6, %cst {dimension_numbers = #tpu.dot_dimension_numbers<[1], [0], [0], [1], [0, 0, 1, 1], [], []>} : vector<16x16xf32>, vector<16x384xf32>, vector<16x384xf32> -> vector<16x384xf32>
    %c0_6 = arith.constant 0 : index
    %c0_7 = arith.constant 0 : index
    %c0_8 = arith.constant 0 : index
    %8 = vector.load %arg5[%c0_6, %c0_7, %c0_8] : memref<1x1x384xf32, #tpu.memory_space<vmem>>, vector<1x1x384xf32>
    %9 = vector.shape_cast %8 : vector<1x1x384xf32> to vector<1x384xf32>
    %10 = vector.broadcast %9 : vector<1x384xf32> to vector<16x384xf32>
    %11 = arith.addf %7, %10 : vector<16x384xf32>
    %12 = vector.extract_strided_slice %11 {offsets = [0, 0], sizes = [8, 384], strides = [1, 1]} : vector<16x384xf32> to vector<8x384xf32>
    %c0_9 = arith.constant 0 : index
    %c0_10 = arith.constant 0 : index
    %c0_11 = arith.constant 0 : index
    %13 = vector.load %arg9[%c0_9, %c0_10, %c0_11] : memref<8x2x384xf32, #tpu.memory_space<vmem>>, vector<8x1x384xf32>
    %14 = vector.shape_cast %13 : vector<8x1x384xf32> to vector<8x384xf32>
    %15 = vector.shape_cast %12 : vector<8x384xf32> to vector<8x1x384xf32>
    tpu.vector_store %arg9[%c0_9, %c0_10, %c0_11], %15 {strides = array<i32>} : memref<8x2x384xf32, #tpu.memory_space<vmem>>, vector<8x1x384xf32>,
    %16 = vector.extract_strided_slice %11 {offsets = [8, 0], sizes = [8, 384], strides = [1, 1]} : vector<16x384xf32> to vector<8x384xf32>
    %c0_12 = arith.constant 0 : index
    %c1 = arith.constant 1 : index
    %c0_13 = arith.constant 0 : index
    %17 = vector.load %arg9[%c0_12, %c1, %c0_13] : memref<8x2x384xf32, #tpu.memory_space<vmem>>, vector<8x1x384xf32>
    %18 = vector.shape_cast %17 : vector<8x1x384xf32> to vector<8x384xf32>
    %19 = vector.shape_cast %16 : vector<8x384xf32> to vector<8x1x384xf32>
    tpu.vector_store %arg9[%c0_12, %c1, %c0_13], %19 {strides = array<i32>} : memref<8x2x384xf32, #tpu.memory_space<vmem>>, vector<8x1x384xf32>,
    %c0_14 = arith.constant 0 : index
    %c0_15 = arith.constant 0 : index
    %c0_16 = arith.constant 0 : index
    %20 = vector.load %arg4[%c0_14, %c0_15, %c0_16] : memref<1x128x384xf32, #tpu.memory_space<vmem>>, vector<1x128x384xf32>
    %21 = vector.shape_cast %20 : vector<1x128x384xf32> to vector<128x384xf32>
    %c0_17 = arith.constant 0 : index
    %c0_18 = arith.constant 0 : index
    %c0_19 = arith.constant 0 : index
    %22 = vector.load %arg6[%c0_17, %c0_18, %c0_19] : memref<1x1x128xf32, #tpu.memory_space<vmem>>, vector<1x1x128xf32>
    %23 = vector.shape_cast %22 : vector<1x1x128xf32> to vector<1x128xf32>
    %24 = vector.shape_cast %23 : vector<1x128xf32> to vector<1x128xf32>
    %25 = vector.broadcast %24 : vector<1x128xf32> to vector<2x128xf32>
    %c0_20 = arith.constant 0 : index
    %c0_21 = arith.constant 0 : index
    %26 = vector.load %arg11[%c0_20, %c0_21] : memref<2x128xf32, #tpu.memory_space<vmem>>, vector<2x128xf32>
    %c0_i32_22 = arith.constant 0 : i32
    %c2_i32 = arith.constant 2 : i32
    %27 = arith.muli %c2_i32, %c0_i32_22 : i32
    %c7_i32 = arith.constant 7 : i32
    %28 = arith.subi %c7_i32, %27 : i32
    %29 = arith.muli %arg0, %28 : i32
    %30 = arith.addi %c0_i32_22, %29 : i32
    %31 = arith.index_cast %30 : i32 to index
    %c0_23 = arith.constant 0 : index
    %c0_24 = arith.constant 0 : index
    %32 = vector.load %arg9[%31, %c0_23, %c0_24] : memref<8x2x384xf32, #tpu.memory_space<vmem>>, vector<1x2x384xf32>
    %33 = vector.shape_cast %32 : vector<1x2x384xf32> to vector<2x384xf32>
    %cst_25 = arith.constant dense<0.000000e+00> : vector<2x384xf32>
    %34 = tpu.matmul %26, %21, %cst_25 {dimension_numbers = #tpu.dot_dimension_numbers<[1], [0], [0], [1], [0, 0, 1, 1], [], []>} : vector<2x128xf32>, vector<128x384xf32>, vector<2x384xf32> -> vector<2x384xf32>
    %35 = vector.extract_strided_slice %33 {offsets = [0, 0], sizes = [2, 128], strides = [1, 1]} : vector<2x384xf32> to vector<2x128xf32>
    %36 = vector.extract_strided_slice %34 {offsets = [0, 0], sizes = [2, 128], strides = [1, 1]} : vector<2x384xf32> to vector<2x128xf32>
    %37 = arith.addf %35, %36 : vector<2x128xf32>
    %38 = arith.negf %37 : vector<2x128xf32>
    %39 = math.exp %38 : vector<2x128xf32>
    %cst_26 = arith.constant 1.000000e+00 : f32
    %40 = vector.broadcast %cst_26 : f32 to vector<2x128xf32>
    %41 = arith.addf %40, %39 : vector<2x128xf32>
    %42 = arith.divf %40, %41 : vector<2x128xf32>
    %43 = vector.extract_strided_slice %33 {offsets = [0, 128], sizes = [2, 128], strides = [1, 1]} : vector<2x384xf32> to vector<2x128xf32>
    %44 = vector.extract_strided_slice %34 {offsets = [0, 128], sizes = [2, 128], strides = [1, 1]} : vector<2x384xf32> to vector<2x128xf32>
    %45 = arith.addf %43, %44 : vector<2x128xf32>
    %46 = arith.negf %45 : vector<2x128xf32>
    %47 = math.exp %46 : vector<2x128xf32>
    %cst_27 = arith.constant 1.000000e+00 : f32
    %48 = vector.broadcast %cst_27 : f32 to vector<2x128xf32>
    %49 = arith.addf %48, %47 : vector<2x128xf32>
    %50 = arith.divf %48, %49 : vector<2x128xf32>
    %51 = vector.extract_strided_slice %33 {offsets = [0, 256], sizes = [2, 128], strides = [1, 1]} : vector<2x384xf32> to vector<2x128xf32>
    %52 = vector.extract_strided_slice %34 {offsets = [0, 256], sizes = [2, 128], strides = [1, 1]} : vector<2x384xf32> to vector<2x128xf32>
    %53 = arith.addf %52, %25 : vector<2x128xf32>
    %54 = arith.mulf %42, %53 : vector<2x128xf32>
    %55 = arith.addf %51, %54 : vector<2x128xf32>
    %56 = math.tanh %55 : vector<2x128xf32>
    %cst_28 = arith.constant 1.000000e+00 : f32
    %57 = vector.broadcast %cst_28 : f32 to vector<2x128xf32>
    %58 = arith.subf %57, %50 : vector<2x128xf32>
    %59 = arith.mulf %58, %56 : vector<2x128xf32>
    %60 = arith.mulf %50, %26 : vector<2x128xf32>
    %61 = arith.addf %59, %60 : vector<2x128xf32>
    %62 = arith.index_cast %30 : i32 to index
    %c0_29 = arith.constant 0 : index
    %c0_30 = arith.constant 0 : index
    %63 = vector.load %arg10[%62, %c0_29, %c0_30] : memref<8x2x128xf32, #tpu.memory_space<vmem>>, vector<1x2x128xf32>
    %64 = vector.shape_cast %63 : vector<1x2x128xf32> to vector<2x128xf32>
    %65 = vector.shape_cast %61 : vector<2x128xf32> to vector<1x2x128xf32>
    tpu.vector_store %arg10[%62, %c0_29, %c0_30], %65 {strides = array<i32>} : memref<8x2x128xf32, #tpu.memory_space<vmem>>, vector<1x2x128xf32>,
    %c1_i32 = arith.constant 1 : i32
    %c2_i32_31 = arith.constant 2 : i32
    %66 = arith.muli %c2_i32_31, %c1_i32 : i32
    %c7_i32_32 = arith.constant 7 : i32
    %67 = arith.subi %c7_i32_32, %66 : i32
    %68 = arith.muli %arg0, %67 : i32
    %69 = arith.addi %c1_i32, %68 : i32
    %70 = arith.index_cast %69 : i32 to index
    %c0_33 = arith.constant 0 : index
    %c0_34 = arith.constant 0 : index
    %71 = vector.load %arg9[%70, %c0_33, %c0_34] : memref<8x2x384xf32, #tpu.memory_space<vmem>>, vector<1x2x384xf32>
    %72 = vector.shape_cast %71 : vector<1x2x384xf32> to vector<2x384xf32>
    %cst_35 = arith.constant dense<0.000000e+00> : vector<2x384xf32>
    %73 = tpu.matmul %61, %21, %cst_35 {dimension_numbers = #tpu.dot_dimension_numbers<[1], [0], [0], [1], [0, 0, 1, 1], [], []>} : vector<2x128xf32>, vector<128x384xf32>, vector<2x384xf32> -> vector<2x384xf32>
    %74 = vector.extract_strided_slice %72 {offsets = [0, 0], sizes = [2, 128], strides = [1, 1]} : vector<2x384xf32> to vector<2x128xf32>
    %75 = vector.extract_strided_slice %73 {offsets = [0, 0], sizes = [2, 128], strides = [1, 1]} : vector<2x384xf32> to vector<2x128xf32>
    %76 = arith.addf %74, %75 : vector<2x128xf32>
    %77 = arith.negf %76 : vector<2x128xf32>
    %78 = math.exp %77 : vector<2x128xf32>
    %cst_36 = arith.constant 1.000000e+00 : f32
    %79 = vector.broadcast %cst_36 : f32 to vector<2x128xf32>
    %80 = arith.addf %79, %78 : vector<2x128xf32>
    %81 = arith.divf %79, %80 : vector<2x128xf32>
    %82 = vector.extract_strided_slice %72 {offsets = [0, 128], sizes = [2, 128], strides = [1, 1]} : vector<2x384xf32> to vector<2x128xf32>
    %83 = vector.extract_strided_slice %73 {offsets = [0, 128], sizes = [2, 128], strides = [1, 1]} : vector<2x384xf32> to vector<2x128xf32>
    %84 = arith.addf %82, %83 : vector<2x128xf32>
    %85 = arith.negf %84 : vector<2x128xf32>
    %86 = math.exp %85 : vector<2x128xf32>
    %cst_37 = arith.constant 1.000000e+00 : f32
    %87 = vector.broadcast %cst_37 : f32 to vector<2x128xf32>
    %88 = arith.addf %87, %86 : vector<2x128xf32>
    %89 = arith.divf %87, %88 : vector<2x128xf32>
    %90 = vector.extract_strided_slice %72 {offsets = [0, 256], sizes = [2, 128], strides = [1, 1]} : vector<2x384xf32> to vector<2x128xf32>
    %91 = vector.extract_strided_slice %73 {offsets = [0, 256], sizes = [2, 128], strides = [1, 1]} : vector<2x384xf32> to vector<2x128xf32>
    %92 = arith.addf %91, %25 : vector<2x128xf32>
    %93 = arith.mulf %81, %92 : vector<2x128xf32>
    %94 = arith.addf %90, %93 : vector<2x128xf32>
    %95 = math.tanh %94 : vector<2x128xf32>
    %cst_38 = arith.constant 1.000000e+00 : f32
    %96 = vector.broadcast %cst_38 : f32 to vector<2x128xf32>
    %97 = arith.subf %96, %89 : vector<2x128xf32>
    %98 = arith.mulf %97, %95 : vector<2x128xf32>
    %99 = arith.mulf %89, %61 : vector<2x128xf32>
    %100 = arith.addf %98, %99 : vector<2x128xf32>
    %101 = arith.index_cast %69 : i32 to index
    %c0_39 = arith.constant 0 : index
    %c0_40 = arith.constant 0 : index
    %102 = vector.load %arg10[%101, %c0_39, %c0_40] : memref<8x2x128xf32, #tpu.memory_space<vmem>>, vector<1x2x128xf32>
    %103 = vector.shape_cast %102 : vector<1x2x128xf32> to vector<2x128xf32>
    %104 = vector.shape_cast %100 : vector<2x128xf32> to vector<1x2x128xf32>
    tpu.vector_store %arg10[%101, %c0_39, %c0_40], %104 {strides = array<i32>} : memref<8x2x128xf32, #tpu.memory_space<vmem>>, vector<1x2x128xf32>,
    %c2_i32_41 = arith.constant 2 : i32
    %c2_i32_42 = arith.constant 2 : i32
    %105 = arith.muli %c2_i32_42, %c2_i32_41 : i32
    %c7_i32_43 = arith.constant 7 : i32
    %106 = arith.subi %c7_i32_43, %105 : i32
    %107 = arith.muli %arg0, %106 : i32
    %108 = arith.addi %c2_i32_41, %107 : i32
    %109 = arith.index_cast %108 : i32 to index
    %c0_44 = arith.constant 0 : index
    %c0_45 = arith.constant 0 : index
    %110 = vector.load %arg9[%109, %c0_44, %c0_45] : memref<8x2x384xf32, #tpu.memory_space<vmem>>, vector<1x2x384xf32>
    %111 = vector.shape_cast %110 : vector<1x2x384xf32> to vector<2x384xf32>
    %cst_46 = arith.constant dense<0.000000e+00> : vector<2x384xf32>
    %112 = tpu.matmul %100, %21, %cst_46 {dimension_numbers = #tpu.dot_dimension_numbers<[1], [0], [0], [1], [0, 0, 1, 1], [], []>} : vector<2x128xf32>, vector<128x384xf32>, vector<2x384xf32> -> vector<2x384xf32>
    %113 = vector.extract_strided_slice %111 {offsets = [0, 0], sizes = [2, 128], strides = [1, 1]} : vector<2x384xf32> to vector<2x128xf32>
    %114 = vector.extract_strided_slice %112 {offsets = [0, 0], sizes = [2, 128], strides = [1, 1]} : vector<2x384xf32> to vector<2x128xf32>
    %115 = arith.addf %113, %114 : vector<2x128xf32>
    %116 = arith.negf %115 : vector<2x128xf32>
    %117 = math.exp %116 : vector<2x128xf32>
    %cst_47 = arith.constant 1.000000e+00 : f32
    %118 = vector.broadcast %cst_47 : f32 to vector<2x128xf32>
    %119 = arith.addf %118, %117 : vector<2x128xf32>
    %120 = arith.divf %118, %119 : vector<2x128xf32>
    %121 = vector.extract_strided_slice %111 {offsets = [0, 128], sizes = [2, 128], strides = [1, 1]} : vector<2x384xf32> to vector<2x128xf32>
    %122 = vector.extract_strided_slice %112 {offsets = [0, 128], sizes = [2, 128], strides = [1, 1]} : vector<2x384xf32> to vector<2x128xf32>
    %123 = arith.addf %121, %122 : vector<2x128xf32>
    %124 = arith.negf %123 : vector<2x128xf32>
    %125 = math.exp %124 : vector<2x128xf32>
    %cst_48 = arith.constant 1.000000e+00 : f32
    %126 = vector.broadcast %cst_48 : f32 to vector<2x128xf32>
    %127 = arith.addf %126, %125 : vector<2x128xf32>
    %128 = arith.divf %126, %127 : vector<2x128xf32>
    %129 = vector.extract_strided_slice %111 {offsets = [0, 256], sizes = [2, 128], strides = [1, 1]} : vector<2x384xf32> to vector<2x128xf32>
    %130 = vector.extract_strided_slice %112 {offsets = [0, 256], sizes = [2, 128], strides = [1, 1]} : vector<2x384xf32> to vector<2x128xf32>
    %131 = arith.addf %130, %25 : vector<2x128xf32>
    %132 = arith.mulf %120, %131 : vector<2x128xf32>
    %133 = arith.addf %129, %132 : vector<2x128xf32>
    %134 = math.tanh %133 : vector<2x128xf32>
    %cst_49 = arith.constant 1.000000e+00 : f32
    %135 = vector.broadcast %cst_49 : f32 to vector<2x128xf32>
    %136 = arith.subf %135, %128 : vector<2x128xf32>
    %137 = arith.mulf %136, %134 : vector<2x128xf32>
    %138 = arith.mulf %128, %100 : vector<2x128xf32>
    %139 = arith.addf %137, %138 : vector<2x128xf32>
    %140 = arith.index_cast %108 : i32 to index
    %c0_50 = arith.constant 0 : index
    %c0_51 = arith.constant 0 : index
    %141 = vector.load %arg10[%140, %c0_50, %c0_51] : memref<8x2x128xf32, #tpu.memory_space<vmem>>, vector<1x2x128xf32>
    %142 = vector.shape_cast %141 : vector<1x2x128xf32> to vector<2x128xf32>
    %143 = vector.shape_cast %139 : vector<2x128xf32> to vector<1x2x128xf32>
    tpu.vector_store %arg10[%140, %c0_50, %c0_51], %143 {strides = array<i32>} : memref<8x2x128xf32, #tpu.memory_space<vmem>>, vector<1x2x128xf32>,
    %c3_i32 = arith.constant 3 : i32
    %c2_i32_52 = arith.constant 2 : i32
    %144 = arith.muli %c2_i32_52, %c3_i32 : i32
    %c7_i32_53 = arith.constant 7 : i32
    %145 = arith.subi %c7_i32_53, %144 : i32
    %146 = arith.muli %arg0, %145 : i32
    %147 = arith.addi %c3_i32, %146 : i32
    %148 = arith.index_cast %147 : i32 to index
    %c0_54 = arith.constant 0 : index
    %c0_55 = arith.constant 0 : index
    %149 = vector.load %arg9[%148, %c0_54, %c0_55] : memref<8x2x384xf32, #tpu.memory_space<vmem>>, vector<1x2x384xf32>
    %150 = vector.shape_cast %149 : vector<1x2x384xf32> to vector<2x384xf32>
    %cst_56 = arith.constant dense<0.000000e+00> : vector<2x384xf32>
    %151 = tpu.matmul %139, %21, %cst_56 {dimension_numbers = #tpu.dot_dimension_numbers<[1], [0], [0], [1], [0, 0, 1, 1], [], []>} : vector<2x128xf32>, vector<128x384xf32>, vector<2x384xf32> -> vector<2x384xf32>
    %152 = vector.extract_strided_slice %150 {offsets = [0, 0], sizes = [2, 128], strides = [1, 1]} : vector<2x384xf32> to vector<2x128xf32>
    %153 = vector.extract_strided_slice %151 {offsets = [0, 0], sizes = [2, 128], strides = [1, 1]} : vector<2x384xf32> to vector<2x128xf32>
    %154 = arith.addf %152, %153 : vector<2x128xf32>
    %155 = arith.negf %154 : vector<2x128xf32>
    %156 = math.exp %155 : vector<2x128xf32>
    %cst_57 = arith.constant 1.000000e+00 : f32
    %157 = vector.broadcast %cst_57 : f32 to vector<2x128xf32>
    %158 = arith.addf %157, %156 : vector<2x128xf32>
    %159 = arith.divf %157, %158 : vector<2x128xf32>
    %160 = vector.extract_strided_slice %150 {offsets = [0, 128], sizes = [2, 128], strides = [1, 1]} : vector<2x384xf32> to vector<2x128xf32>
    %161 = vector.extract_strided_slice %151 {offsets = [0, 128], sizes = [2, 128], strides = [1, 1]} : vector<2x384xf32> to vector<2x128xf32>
    %162 = arith.addf %160, %161 : vector<2x128xf32>
    %163 = arith.negf %162 : vector<2x128xf32>
    %164 = math.exp %163 : vector<2x128xf32>
    %cst_58 = arith.constant 1.000000e+00 : f32
    %165 = vector.broadcast %cst_58 : f32 to vector<2x128xf32>
    %166 = arith.addf %165, %164 : vector<2x128xf32>
    %167 = arith.divf %165, %166 : vector<2x128xf32>
    %168 = vector.extract_strided_slice %150 {offsets = [0, 256], sizes = [2, 128], strides = [1, 1]} : vector<2x384xf32> to vector<2x128xf32>
    %169 = vector.extract_strided_slice %151 {offsets = [0, 256], sizes = [2, 128], strides = [1, 1]} : vector<2x384xf32> to vector<2x128xf32>
    %170 = arith.addf %169, %25 : vector<2x128xf32>
    %171 = arith.mulf %159, %170 : vector<2x128xf32>
    %172 = arith.addf %168, %171 : vector<2x128xf32>
    %173 = math.tanh %172 : vector<2x128xf32>
    %cst_59 = arith.constant 1.000000e+00 : f32
    %174 = vector.broadcast %cst_59 : f32 to vector<2x128xf32>
    %175 = arith.subf %174, %167 : vector<2x128xf32>
    %176 = arith.mulf %175, %173 : vector<2x128xf32>
    %177 = arith.mulf %167, %139 : vector<2x128xf32>
    %178 = arith.addf %176, %177 : vector<2x128xf32>
    %179 = arith.index_cast %147 : i32 to index
    %c0_60 = arith.constant 0 : index
    %c0_61 = arith.constant 0 : index
    %180 = vector.load %arg10[%179, %c0_60, %c0_61] : memref<8x2x128xf32, #tpu.memory_space<vmem>>, vector<1x2x128xf32>
    %181 = vector.shape_cast %180 : vector<1x2x128xf32> to vector<2x128xf32>
    %182 = vector.shape_cast %178 : vector<2x128xf32> to vector<1x2x128xf32>
    tpu.vector_store %arg10[%179, %c0_60, %c0_61], %182 {strides = array<i32>} : memref<8x2x128xf32, #tpu.memory_space<vmem>>, vector<1x2x128xf32>,
    %c4_i32 = arith.constant 4 : i32
    %c2_i32_62 = arith.constant 2 : i32
    %183 = arith.muli %c2_i32_62, %c4_i32 : i32
    %c7_i32_63 = arith.constant 7 : i32
    %184 = arith.subi %c7_i32_63, %183 : i32
    %185 = arith.muli %arg0, %184 : i32
    %186 = arith.addi %c4_i32, %185 : i32
    %187 = arith.index_cast %186 : i32 to index
    %c0_64 = arith.constant 0 : index
    %c0_65 = arith.constant 0 : index
    %188 = vector.load %arg9[%187, %c0_64, %c0_65] : memref<8x2x384xf32, #tpu.memory_space<vmem>>, vector<1x2x384xf32>
    %189 = vector.shape_cast %188 : vector<1x2x384xf32> to vector<2x384xf32>
    %cst_66 = arith.constant dense<0.000000e+00> : vector<2x384xf32>
    %190 = tpu.matmul %178, %21, %cst_66 {dimension_numbers = #tpu.dot_dimension_numbers<[1], [0], [0], [1], [0, 0, 1, 1], [], []>} : vector<2x128xf32>, vector<128x384xf32>, vector<2x384xf32> -> vector<2x384xf32>
    %191 = vector.extract_strided_slice %189 {offsets = [0, 0], sizes = [2, 128], strides = [1, 1]} : vector<2x384xf32> to vector<2x128xf32>
    %192 = vector.extract_strided_slice %190 {offsets = [0, 0], sizes = [2, 128], strides = [1, 1]} : vector<2x384xf32> to vector<2x128xf32>
    %193 = arith.addf %191, %192 : vector<2x128xf32>
    %194 = arith.negf %193 : vector<2x128xf32>
    %195 = math.exp %194 : vector<2x128xf32>
    %cst_67 = arith.constant 1.000000e+00 : f32
    %196 = vector.broadcast %cst_67 : f32 to vector<2x128xf32>
    %197 = arith.addf %196, %195 : vector<2x128xf32>
    %198 = arith.divf %196, %197 : vector<2x128xf32>
    %199 = vector.extract_strided_slice %189 {offsets = [0, 128], sizes = [2, 128], strides = [1, 1]} : vector<2x384xf32> to vector<2x128xf32>
    %200 = vector.extract_strided_slice %190 {offsets = [0, 128], sizes = [2, 128], strides = [1, 1]} : vector<2x384xf32> to vector<2x128xf32>
    %201 = arith.addf %199, %200 : vector<2x128xf32>
    %202 = arith.negf %201 : vector<2x128xf32>
    %203 = math.exp %202 : vector<2x128xf32>
    %cst_68 = arith.constant 1.000000e+00 : f32
    %204 = vector.broadcast %cst_68 : f32 to vector<2x128xf32>
    %205 = arith.addf %204, %203 : vector<2x128xf32>
    %206 = arith.divf %204, %205 : vector<2x128xf32>
    %207 = vector.extract_strided_slice %189 {offsets = [0, 256], sizes = [2, 128], strides = [1, 1]} : vector<2x384xf32> to vector<2x128xf32>
    %208 = vector.extract_strided_slice %190 {offsets = [0, 256], sizes = [2, 128], strides = [1, 1]} : vector<2x384xf32> to vector<2x128xf32>
    %209 = arith.addf %208, %25 : vector<2x128xf32>
    %210 = arith.mulf %198, %209 : vector<2x128xf32>
    %211 = arith.addf %207, %210 : vector<2x128xf32>
    %212 = math.tanh %211 : vector<2x128xf32>
    %cst_69 = arith.constant 1.000000e+00 : f32
    %213 = vector.broadcast %cst_69 : f32 to vector<2x128xf32>
    %214 = arith.subf %213, %206 : vector<2x128xf32>
    %215 = arith.mulf %214, %212 : vector<2x128xf32>
    %216 = arith.mulf %206, %178 : vector<2x128xf32>
    %217 = arith.addf %215, %216 : vector<2x128xf32>
    %218 = arith.index_cast %186 : i32 to index
    %c0_70 = arith.constant 0 : index
    %c0_71 = arith.constant 0 : index
    %219 = vector.load %arg10[%218, %c0_70, %c0_71] : memref<8x2x128xf32, #tpu.memory_space<vmem>>, vector<1x2x128xf32>
    %220 = vector.shape_cast %219 : vector<1x2x128xf32> to vector<2x128xf32>
    %221 = vector.shape_cast %217 : vector<2x128xf32> to vector<1x2x128xf32>
    tpu.vector_store %arg10[%218, %c0_70, %c0_71], %221 {strides = array<i32>} : memref<8x2x128xf32, #tpu.memory_space<vmem>>, vector<1x2x128xf32>,
    %c5_i32 = arith.constant 5 : i32
    %c2_i32_72 = arith.constant 2 : i32
    %222 = arith.muli %c2_i32_72, %c5_i32 : i32
    %c7_i32_73 = arith.constant 7 : i32
    %223 = arith.subi %c7_i32_73, %222 : i32
    %224 = arith.muli %arg0, %223 : i32
    %225 = arith.addi %c5_i32, %224 : i32
    %226 = arith.index_cast %225 : i32 to index
    %c0_74 = arith.constant 0 : index
    %c0_75 = arith.constant 0 : index
    %227 = vector.load %arg9[%226, %c0_74, %c0_75] : memref<8x2x384xf32, #tpu.memory_space<vmem>>, vector<1x2x384xf32>
    %228 = vector.shape_cast %227 : vector<1x2x384xf32> to vector<2x384xf32>
    %cst_76 = arith.constant dense<0.000000e+00> : vector<2x384xf32>
    %229 = tpu.matmul %217, %21, %cst_76 {dimension_numbers = #tpu.dot_dimension_numbers<[1], [0], [0], [1], [0, 0, 1, 1], [], []>} : vector<2x128xf32>, vector<128x384xf32>, vector<2x384xf32> -> vector<2x384xf32>
    %230 = vector.extract_strided_slice %228 {offsets = [0, 0], sizes = [2, 128], strides = [1, 1]} : vector<2x384xf32> to vector<2x128xf32>
    %231 = vector.extract_strided_slice %229 {offsets = [0, 0], sizes = [2, 128], strides = [1, 1]} : vector<2x384xf32> to vector<2x128xf32>
    %232 = arith.addf %230, %231 : vector<2x128xf32>
    %233 = arith.negf %232 : vector<2x128xf32>
    %234 = math.exp %233 : vector<2x128xf32>
    %cst_77 = arith.constant 1.000000e+00 : f32
    %235 = vector.broadcast %cst_77 : f32 to vector<2x128xf32>
    %236 = arith.addf %235, %234 : vector<2x128xf32>
    %237 = arith.divf %235, %236 : vector<2x128xf32>
    %238 = vector.extract_strided_slice %228 {offsets = [0, 128], sizes = [2, 128], strides = [1, 1]} : vector<2x384xf32> to vector<2x128xf32>
    %239 = vector.extract_strided_slice %229 {offsets = [0, 128], sizes = [2, 128], strides = [1, 1]} : vector<2x384xf32> to vector<2x128xf32>
    %240 = arith.addf %238, %239 : vector<2x128xf32>
    %241 = arith.negf %240 : vector<2x128xf32>
    %242 = math.exp %241 : vector<2x128xf32>
    %cst_78 = arith.constant 1.000000e+00 : f32
    %243 = vector.broadcast %cst_78 : f32 to vector<2x128xf32>
    %244 = arith.addf %243, %242 : vector<2x128xf32>
    %245 = arith.divf %243, %244 : vector<2x128xf32>
    %246 = vector.extract_strided_slice %228 {offsets = [0, 256], sizes = [2, 128], strides = [1, 1]} : vector<2x384xf32> to vector<2x128xf32>
    %247 = vector.extract_strided_slice %229 {offsets = [0, 256], sizes = [2, 128], strides = [1, 1]} : vector<2x384xf32> to vector<2x128xf32>
    %248 = arith.addf %247, %25 : vector<2x128xf32>
    %249 = arith.mulf %237, %248 : vector<2x128xf32>
    %250 = arith.addf %246, %249 : vector<2x128xf32>
    %251 = math.tanh %250 : vector<2x128xf32>
    %cst_79 = arith.constant 1.000000e+00 : f32
    %252 = vector.broadcast %cst_79 : f32 to vector<2x128xf32>
    %253 = arith.subf %252, %245 : vector<2x128xf32>
    %254 = arith.mulf %253, %251 : vector<2x128xf32>
    %255 = arith.mulf %245, %217 : vector<2x128xf32>
    %256 = arith.addf %254, %255 : vector<2x128xf32>
    %257 = arith.index_cast %225 : i32 to index
    %c0_80 = arith.constant 0 : index
    %c0_81 = arith.constant 0 : index
    %258 = vector.load %arg10[%257, %c0_80, %c0_81] : memref<8x2x128xf32, #tpu.memory_space<vmem>>, vector<1x2x128xf32>
    %259 = vector.shape_cast %258 : vector<1x2x128xf32> to vector<2x128xf32>
    %260 = vector.shape_cast %256 : vector<2x128xf32> to vector<1x2x128xf32>
    tpu.vector_store %arg10[%257, %c0_80, %c0_81], %260 {strides = array<i32>} : memref<8x2x128xf32, #tpu.memory_space<vmem>>, vector<1x2x128xf32>,
    %c6_i32 = arith.constant 6 : i32
    %c2_i32_82 = arith.constant 2 : i32
    %261 = arith.muli %c2_i32_82, %c6_i32 : i32
    %c7_i32_83 = arith.constant 7 : i32
    %262 = arith.subi %c7_i32_83, %261 : i32
    %263 = arith.muli %arg0, %262 : i32
    %264 = arith.addi %c6_i32, %263 : i32
    %265 = arith.index_cast %264 : i32 to index
    %c0_84 = arith.constant 0 : index
    %c0_85 = arith.constant 0 : index
    %266 = vector.load %arg9[%265, %c0_84, %c0_85] : memref<8x2x384xf32, #tpu.memory_space<vmem>>, vector<1x2x384xf32>
    %267 = vector.shape_cast %266 : vector<1x2x384xf32> to vector<2x384xf32>
    %cst_86 = arith.constant dense<0.000000e+00> : vector<2x384xf32>
    %268 = tpu.matmul %256, %21, %cst_86 {dimension_numbers = #tpu.dot_dimension_numbers<[1], [0], [0], [1], [0, 0, 1, 1], [], []>} : vector<2x128xf32>, vector<128x384xf32>, vector<2x384xf32> -> vector<2x384xf32>
    %269 = vector.extract_strided_slice %267 {offsets = [0, 0], sizes = [2, 128], strides = [1, 1]} : vector<2x384xf32> to vector<2x128xf32>
    %270 = vector.extract_strided_slice %268 {offsets = [0, 0], sizes = [2, 128], strides = [1, 1]} : vector<2x384xf32> to vector<2x128xf32>
    %271 = arith.addf %269, %270 : vector<2x128xf32>
    %272 = arith.negf %271 : vector<2x128xf32>
    %273 = math.exp %272 : vector<2x128xf32>
    %cst_87 = arith.constant 1.000000e+00 : f32
    %274 = vector.broadcast %cst_87 : f32 to vector<2x128xf32>
    %275 = arith.addf %274, %273 : vector<2x128xf32>
    %276 = arith.divf %274, %275 : vector<2x128xf32>
    %277 = vector.extract_strided_slice %267 {offsets = [0, 128], sizes = [2, 128], strides = [1, 1]} : vector<2x384xf32> to vector<2x128xf32>
    %278 = vector.extract_strided_slice %268 {offsets = [0, 128], sizes = [2, 128], strides = [1, 1]} : vector<2x384xf32> to vector<2x128xf32>
    %279 = arith.addf %277, %278 : vector<2x128xf32>
    %280 = arith.negf %279 : vector<2x128xf32>
    %281 = math.exp %280 : vector<2x128xf32>
    %cst_88 = arith.constant 1.000000e+00 : f32
    %282 = vector.broadcast %cst_88 : f32 to vector<2x128xf32>
    %283 = arith.addf %282, %281 : vector<2x128xf32>
    %284 = arith.divf %282, %283 : vector<2x128xf32>
    %285 = vector.extract_strided_slice %267 {offsets = [0, 256], sizes = [2, 128], strides = [1, 1]} : vector<2x384xf32> to vector<2x128xf32>
    %286 = vector.extract_strided_slice %268 {offsets = [0, 256], sizes = [2, 128], strides = [1, 1]} : vector<2x384xf32> to vector<2x128xf32>
    %287 = arith.addf %286, %25 : vector<2x128xf32>
    %288 = arith.mulf %276, %287 : vector<2x128xf32>
    %289 = arith.addf %285, %288 : vector<2x128xf32>
    %290 = math.tanh %289 : vector<2x128xf32>
    %cst_89 = arith.constant 1.000000e+00 : f32
    %291 = vector.broadcast %cst_89 : f32 to vector<2x128xf32>
    %292 = arith.subf %291, %284 : vector<2x128xf32>
    %293 = arith.mulf %292, %290 : vector<2x128xf32>
    %294 = arith.mulf %284, %256 : vector<2x128xf32>
    %295 = arith.addf %293, %294 : vector<2x128xf32>
    %296 = arith.index_cast %264 : i32 to index
    %c0_90 = arith.constant 0 : index
    %c0_91 = arith.constant 0 : index
    %297 = vector.load %arg10[%296, %c0_90, %c0_91] : memref<8x2x128xf32, #tpu.memory_space<vmem>>, vector<1x2x128xf32>
    %298 = vector.shape_cast %297 : vector<1x2x128xf32> to vector<2x128xf32>
    %299 = vector.shape_cast %295 : vector<2x128xf32> to vector<1x2x128xf32>
    tpu.vector_store %arg10[%296, %c0_90, %c0_91], %299 {strides = array<i32>} : memref<8x2x128xf32, #tpu.memory_space<vmem>>, vector<1x2x128xf32>,
    %c7_i32_92 = arith.constant 7 : i32
    %c2_i32_93 = arith.constant 2 : i32
    %300 = arith.muli %c2_i32_93, %c7_i32_92 : i32
    %c7_i32_94 = arith.constant 7 : i32
    %301 = arith.subi %c7_i32_94, %300 : i32
    %302 = arith.muli %arg0, %301 : i32
    %303 = arith.addi %c7_i32_92, %302 : i32
    %304 = arith.index_cast %303 : i32 to index
    %c0_95 = arith.constant 0 : index
    %c0_96 = arith.constant 0 : index
    %305 = vector.load %arg9[%304, %c0_95, %c0_96] : memref<8x2x384xf32, #tpu.memory_space<vmem>>, vector<1x2x384xf32>
    %306 = vector.shape_cast %305 : vector<1x2x384xf32> to vector<2x384xf32>
    %cst_97 = arith.constant dense<0.000000e+00> : vector<2x384xf32>
    %307 = tpu.matmul %295, %21, %cst_97 {dimension_numbers = #tpu.dot_dimension_numbers<[1], [0], [0], [1], [0, 0, 1, 1], [], []>} : vector<2x128xf32>, vector<128x384xf32>, vector<2x384xf32> -> vector<2x384xf32>
    %308 = vector.extract_strided_slice %306 {offsets = [0, 0], sizes = [2, 128], strides = [1, 1]} : vector<2x384xf32> to vector<2x128xf32>
    %309 = vector.extract_strided_slice %307 {offsets = [0, 0], sizes = [2, 128], strides = [1, 1]} : vector<2x384xf32> to vector<2x128xf32>
    %310 = arith.addf %308, %309 : vector<2x128xf32>
    %311 = arith.negf %310 : vector<2x128xf32>
    %312 = math.exp %311 : vector<2x128xf32>
    %cst_98 = arith.constant 1.000000e+00 : f32
    %313 = vector.broadcast %cst_98 : f32 to vector<2x128xf32>
    %314 = arith.addf %313, %312 : vector<2x128xf32>
    %315 = arith.divf %313, %314 : vector<2x128xf32>
    %316 = vector.extract_strided_slice %306 {offsets = [0, 128], sizes = [2, 128], strides = [1, 1]} : vector<2x384xf32> to vector<2x128xf32>
    %317 = vector.extract_strided_slice %307 {offsets = [0, 128], sizes = [2, 128], strides = [1, 1]} : vector<2x384xf32> to vector<2x128xf32>
    %318 = arith.addf %316, %317 : vector<2x128xf32>
    %319 = arith.negf %318 : vector<2x128xf32>
    %320 = math.exp %319 : vector<2x128xf32>
    %cst_99 = arith.constant 1.000000e+00 : f32
    %321 = vector.broadcast %cst_99 : f32 to vector<2x128xf32>
    %322 = arith.addf %321, %320 : vector<2x128xf32>
    %323 = arith.divf %321, %322 : vector<2x128xf32>
    %324 = vector.extract_strided_slice %306 {offsets = [0, 256], sizes = [2, 128], strides = [1, 1]} : vector<2x384xf32> to vector<2x128xf32>
    %325 = vector.extract_strided_slice %307 {offsets = [0, 256], sizes = [2, 128], strides = [1, 1]} : vector<2x384xf32> to vector<2x128xf32>
    %326 = arith.addf %325, %25 : vector<2x128xf32>
    %327 = arith.mulf %315, %326 : vector<2x128xf32>
    %328 = arith.addf %324, %327 : vector<2x128xf32>
    %329 = math.tanh %328 : vector<2x128xf32>
    %cst_100 = arith.constant 1.000000e+00 : f32
    %330 = vector.broadcast %cst_100 : f32 to vector<2x128xf32>
    %331 = arith.subf %330, %323 : vector<2x128xf32>
    %332 = arith.mulf %331, %329 : vector<2x128xf32>
    %333 = arith.mulf %323, %295 : vector<2x128xf32>
    %334 = arith.addf %332, %333 : vector<2x128xf32>
    %335 = arith.index_cast %303 : i32 to index
    %c0_101 = arith.constant 0 : index
    %c0_102 = arith.constant 0 : index
    %336 = vector.load %arg10[%335, %c0_101, %c0_102] : memref<8x2x128xf32, #tpu.memory_space<vmem>>, vector<1x2x128xf32>
    %337 = vector.shape_cast %336 : vector<1x2x128xf32> to vector<2x128xf32>
    %338 = vector.shape_cast %334 : vector<2x128xf32> to vector<1x2x128xf32>
    tpu.vector_store %arg10[%335, %c0_101, %c0_102], %338 {strides = array<i32>} : memref<8x2x128xf32, #tpu.memory_space<vmem>>, vector<1x2x128xf32>,
    %c8_i32 = arith.constant 8 : i32
    %c0_103 = arith.constant 0 : index
    %c0_104 = arith.constant 0 : index
    %339 = vector.load %arg11[%c0_103, %c0_104] : memref<2x128xf32, #tpu.memory_space<vmem>>, vector<2x128xf32>
    tpu.vector_store %arg11[%c0_103, %c0_104], %334 {strides = array<i32>} : memref<2x128xf32, #tpu.memory_space<vmem>>, vector<2x128xf32>,
    %c0_105 = arith.constant 0 : index
    %c0_106 = arith.constant 0 : index
    %c0_107 = arith.constant 0 : index
    %340 = vector.load %arg8[%c0_105, %c0_106, %c0_107] : memref<1x2x128xf32, #tpu.memory_space<vmem>>, vector<1x2x128xf32>
    %341 = vector.shape_cast %340 : vector<1x2x128xf32> to vector<2x128xf32>
    %342 = vector.shape_cast %334 : vector<2x128xf32> to vector<1x2x128xf32>
    tpu.vector_store %arg8[%c0_105, %c0_106, %c0_107], %342 {strides = array<i32>} : memref<1x2x128xf32, #tpu.memory_space<vmem>>, vector<1x2x128xf32>,
    %c0_108 = arith.constant 0 : index
    %c0_109 = arith.constant 0 : index
    %c0_110 = arith.constant 0 : index
    %343 = vector.load %arg10[%c0_108, %c0_109, %c0_110] : memref<8x2x128xf32, #tpu.memory_space<vmem>>, vector<8x1x128xf32>
    %344 = vector.shape_cast %343 : vector<8x1x128xf32> to vector<8x128xf32>
    %c0_111 = arith.constant 0 : index
    %c0_112 = arith.constant 0 : index
    %c0_113 = arith.constant 0 : index
    %345 = vector.load %arg7[%c0_111, %c0_112, %c0_113] : memref<2x8x128xf32, #tpu.memory_space<vmem>>, vector<1x8x128xf32>
    %346 = vector.shape_cast %345 : vector<1x8x128xf32> to vector<8x128xf32>
    %347 = vector.shape_cast %344 : vector<8x128xf32> to vector<1x8x128xf32>
    tpu.vector_store %arg7[%c0_111, %c0_112, %c0_113], %347 {strides = array<i32>} : memref<2x8x128xf32, #tpu.memory_space<vmem>>, vector<1x8x128xf32>,
    %c0_114 = arith.constant 0 : index
    %c1_115 = arith.constant 1 : index
    %c0_116 = arith.constant 0 : index
    %348 = vector.load %arg10[%c0_114, %c1_115, %c0_116] : memref<8x2x128xf32, #tpu.memory_space<vmem>>, vector<8x1x128xf32>
    %349 = vector.shape_cast %348 : vector<8x1x128xf32> to vector<8x128xf32>
    %c1_117 = arith.constant 1 : index
    %c0_118 = arith.constant 0 : index
    %c0_119 = arith.constant 0 : index
    %350 = vector.load %arg7[%c1_117, %c0_118, %c0_119] : memref<2x8x128xf32, #tpu.memory_space<vmem>>, vector<1x8x128xf32>
    %351 = vector.shape_cast %350 : vector<1x8x128xf32> to vector<8x128xf32>
    %352 = vector.shape_cast %349 : vector<8x128xf32> to vector<1x8x128xf32>
    tpu.vector_store %arg7[%c1_117, %c0_118, %c0_119], %352 {strides = array<i32>} : memref<2x8x128xf32, #tpu.memory_space<vmem>>, vector<1x8x128xf32>,
    return
  }
  func.func @transform_0(%arg0: i32, %arg1: i32) -> (i32, i32, i32) {
    %c2_i32 = arith.constant 2 : i32
    %0 = arith.muli %c2_i32, %arg1 : i32
    %c0_i32 = arith.constant 0 : i32
    %1 = arith.subi %c0_i32, %0 : i32
    %2 = arith.muli %arg0, %1 : i32
    %3 = arith.addi %arg1, %2 : i32
    %c0_i32_0 = arith.constant 0 : i32
    %c0_i32_1 = arith.constant 0 : i32
    %c0_i32_2 = arith.constant 0 : i32
    return %c0_i32_0, %3, %c0_i32_1 : i32, i32, i32
  }
  func.func @transform_1(%arg0: i32, %arg1: i32) -> (i32, i32, i32) {
    %c0_i32 = arith.constant 0 : i32
    %c0_i32_0 = arith.constant 0 : i32
    %c0_i32_1 = arith.constant 0 : i32
    return %arg0, %c0_i32, %c0_i32_0 : i32, i32, i32
  }
  func.func @transform_2(%arg0: i32, %arg1: i32) -> (i32, i32, i32) {
    %c0_i32 = arith.constant 0 : i32
    %c0_i32_0 = arith.constant 0 : i32
    %c0_i32_1 = arith.constant 0 : i32
    return %arg0, %c0_i32, %c0_i32_0 : i32, i32, i32
  }
  func.func @transform_3(%arg0: i32, %arg1: i32) -> (i32, i32, i32) {
    %c0_i32 = arith.constant 0 : i32
    %c0_i32_0 = arith.constant 0 : i32
    %c0_i32_1 = arith.constant 0 : i32
    return %arg0, %c0_i32, %c0_i32_0 : i32, i32, i32
  }
  func.func @transform_4(%arg0: i32, %arg1: i32) -> (i32, i32, i32) {
    %c0_i32 = arith.constant 0 : i32
    %c0_i32_0 = arith.constant 0 : i32
    %c0_i32_1 = arith.constant 0 : i32
    return %arg0, %c0_i32, %c0_i32_0 : i32, i32, i32
  }
  func.func @transform_5(%arg0: i32, %arg1: i32) -> (i32, i32, i32) {
    %c2_i32 = arith.constant 2 : i32
    %0 = arith.muli %c2_i32, %arg1 : i32
    %c0_i32 = arith.constant 0 : i32
    %1 = arith.subi %c0_i32, %0 : i32
    %2 = arith.muli %arg0, %1 : i32
    %3 = arith.addi %arg1, %2 : i32
    %c0_i32_0 = arith.constant 0 : i32
    %c0_i32_1 = arith.constant 0 : i32
    return %c0_i32_0, %3, %arg0 : i32, i32, i32
  }
  func.func @transform_6(%arg0: i32, %arg1: i32) -> (i32, i32, i32) {
    %c0_i32 = arith.constant 0 : i32
    %c0_i32_0 = arith.constant 0 : i32
    %c0_i32_1 = arith.constant 0 : i32
    return %arg0, %c0_i32, %c0_i32_0 : i32, i32, i32
  }
}

</mosaic_0001>

<llo_original>
// kernel: _encoder_impl.1
$region0: #{_encoder_impl.1}
  #allocation0 [shape = 'u32[]', space=smem, size = 0x4, offset = 0x4, fixed_abs, tag = 'smem constant byte address 0x4 - core index']
  #allocation1 [shape = 'u32[72,128]{1,0:T(1,128)}', space=vmem, size = 0x9000, scoped, tag = 'internal scratch']
  #allocation2 [shape = 'f32[8,2,384]{2,1,0:T(2,128)}', space=vmem, size = 0x6000, scoped, tag = 'scratch operand']
  #allocation3 [shape = 'f32[8,2,128]{2,1,0:T(2,128)}', space=vmem, size = 0x2000, scoped, tag = 'scratch operand']
  #allocation4 [shape = 'f32[2,128]{1,0:T(2,128)}', space=vmem, size = 0x400, scoped, tag = 'scratch operand']
  %s0 = inlined_call_operand.vmem [shape: f32[2,8,16], index: 0, kind: input, shape index: {}]
  %s1 = inlined_call_operand.vmem [shape: f32[2,16,384], index: 1, kind: input, shape index: {}]
  %s2 = inlined_call_operand.vmem [shape: f32[2,128,384], index: 2, kind: input, shape index: {}]
  %s3 = inlined_call_operand.vmem [shape: f32[2,1,384], index: 3, kind: input, shape index: {}]
  %s4 = inlined_call_operand.vmem [shape: f32[2,1,128], index: 4, kind: input, shape index: {}]
  %s5 = inlined_call_operand.vmem [shape: f32[2,8,256], index: 5, kind: output, shape index: {0}]
  %s6 = inlined_call_operand.vmem [shape: f32[2,2,128], index: 6, kind: output, shape index: {1}]
  %7 = xla_tuple %s5, %s6
  %s8 = sld [smem:[#allocation0]]
  $region99: #{_encoder_impl.1} parent=0
    _
  %s10 = ssub.s32 1, %s8
  %s11 = scalar_select 0, %s10, %s8
  $region1: #{_encoder_impl.1} parent=0
    #allocation5 [shape = 'u8[16384]{0}', space=vmem, size = 0x4000, scoped, tag = 'output window, operand 0']
    loop: start=0, step=1, limit=4
    $region2: #{_encoder_impl.1} parent=1 // loop_pre_header
      _
    $region3: #{_encoder_impl.1} parent=1 // loop_header
      %s13 = sphi 0, %s17
      %p14 = scmp.ge.s32.totalorder %s13, 4
      %s20 = sphi 0, %s32
      %s21 = sphi 0, %s28
      %s22 = sphi 0, %s20
      %s23 = sphi 0, %s21
      %s24 = sphi 0, %s22
      %s25 = sphi 0, %s23
      %s43 = sphi 0, %s45
      %s46 = sphi 0, %s43
      %s47 = sphi 0, %s46
      %s63 = sphi 0, %s47
      %s69 = sphi 0, %s71
      %s72 = sphi 0, %s69
      %s73 = sphi 0, %s72
      %s89 = sphi 0, %s73
      %s95 = sphi 0, %s97
      %s98 = sphi 0, %s95
      %s99 = sphi 0, %s98
      %s115 = sphi 0, %s99
      %s121 = sphi 0, %s123
      %s124 = sphi 0, %s121
      %s125 = sphi 0, %s124
      %s141 = sphi 0, %s125
      %s147 = sphi 0, %s149
      %s150 = sphi 0, %s147
      %s151 = sphi 0, %s150
      %s167 = sphi 0, %s151
      %s183 = sphi 0, %s185
      %s186 = sphi 0, %s183
      %s187 = sphi 0, %s186
      %s203 = sphi 0, %s187
      %s209 = sphi 0, %s211
      %s212 = sphi 0, %s209
      %s213 = sphi 0, %s212
      %s229 = sphi 0, %s213
    $region4: #{_encoder_impl.1} parent=1 // loop_header_branch
      %16 = sbr.rel (%p14) target = $region8
    $region5: #{_encoder_impl.1} parent=1 // loop_body
      %s18 = ssub.s32 %s13, 1
      %s19 = ssub.s32 %s13, 2
      %s26 = sadd.s32 1, %s21
      %p27 = scmp.ge.s32.totalorder %s26, 1
      %s28 = scalar_select %p27, 0, %s26
      %s29 = sadd.s32 1, %s20
      %s30 = scalar_select %p27, %s29, %s20
      %p31 = scmp.ge.s32.totalorder %s30, 2
      %s32 = scalar_select %p31, 0, %s30
      %s33 = smul.u32 %s21, 2
      %s34 = ssub.s32 0, %s33
      %s35 = smul.u32 %s20, %s34
      %s36 = sadd.s32 %s21, %s35
      %s37 = smul.u32 %s28, 2
      %s38 = ssub.s32 0, %s37
      %s39 = smul.u32 %s32, %s38
      %s40 = sadd.s32 %s28, %s39
      %s41 = ssub.s32 %s36, %s40
      %p42 = scmp.eq.s32.totalorder %s41, 0
      %s44 = sadd.s32 %s43, 1
      %s45 = scalar_select %p42, %s43, %s44
      %p48 = pneg %p42
      %p49 = scmp.eq.s32.totalorder %s13, 1
      %p50 = por %p48, %p49
      %p51 = scmp.ne.s32.totalorder %s43, %s46
      %p52 = scmp.eq.s32.totalorder %s13, 0
      %p53 = por %p51, %p52
      %p54 = scmp.ne.s32.totalorder %s43, %s46
      %p55 = scmp.eq.s32.totalorder %s18, 1
      %p56 = por %p54, %p55
      %p57 = scmp.ne.s32.totalorder %s46, %s47
      %p58 = scmp.eq.s32.totalorder %s18, 0
      %p59 = por %p57, %p58
      %p60 = scmp.ne.s32.totalorder %s46, %s47
      %p61 = scmp.eq.s32.totalorder %s19, 1
      %p62 = por %p60, %p61
      %p64 = scmp.ne.s32.totalorder %s47, %s63
      %p65 = scmp.eq.s32.totalorder %s19, 0
      %p66 = por %p64, %p65
      %s67 = ssub.s32 %s20, %s32
      %p68 = scmp.eq.s32.totalorder %s67, 0
      %s70 = sadd.s32 %s69, 1
      %s71 = scalar_select %p68, %s69, %s70
      %p74 = pneg %p68
      %p75 = scmp.eq.s32.totalorder %s13, 1
      %p76 = por %p74, %p75
      %p77 = scmp.ne.s32.totalorder %s69, %s72
      %p78 = scmp.eq.s32.totalorder %s13, 0
      %p79 = por %p77, %p78
      %p80 = scmp.ne.s32.totalorder %s69, %s72
      %p81 = scmp.eq.s32.totalorder %s18, 1
      %p82 = por %p80, %p81
      %p83 = scmp.ne.s32.totalorder %s72, %s73
      %p84 = scmp.eq.s32.totalorder %s18, 0
      %p85 = por %p83, %p84
      %p86 = scmp.ne.s32.totalorder %s72, %s73
      %p87 = scmp.eq.s32.totalorder %s19, 1
      %p88 = por %p86, %p87
      %p90 = scmp.ne.s32.totalorder %s73, %s89
      %p91 = scmp.eq.s32.totalorder %s19, 0
      %p92 = por %p90, %p91
      %s93 = ssub.s32 %s20, %s32
      %p94 = scmp.eq.s32.totalorder %s93, 0
      %s96 = sadd.s32 %s95, 1
      %s97 = scalar_select %p94, %s95, %s96
      %p100 = pneg %p94
      %p101 = scmp.eq.s32.totalorder %s13, 1
      %p102 = por %p100, %p101
      %p103 = scmp.ne.s32.totalorder %s95, %s98
      %p104 = scmp.eq.s32.totalorder %s13, 0
      %p105 = por %p103, %p104
      %p106 = scmp.ne.s32.totalorder %s95, %s98
      %p107 = scmp.eq.s32.totalorder %s18, 1
      %p108 = por %p106, %p107
      %p109 = scmp.ne.s32.totalorder %s98, %s99
      %p110 = scmp.eq.s32.totalorder %s18, 0
      %p111 = por %p109, %p110
      %p112 = scmp.ne.s32.totalorder %s98, %s99
      %p113 = scmp.eq.s32.totalorder %s19, 1
      %p114 = por %p112, %p113
      %p116 = scmp.ne.s32.totalorder %s99, %s115
      %p117 = scmp.eq.s32.totalorder %s19, 0
      %p118 = por %p116, %p117
      %s119 = ssub.s32 %s20, %s32
      %p120 = scmp.eq.s32.totalorder %s119, 0
      %s122 = sadd.s32 %s121, 1
      %s123 = scalar_select %p120, %s121, %s122
      %p126 = pneg %p120
      %p127 = scmp.eq.s32.totalorder %s13, 1
      %p128 = por %p126, %p127
      %p129 = scmp.ne.s32.totalorder %s121, %s124
      %p130 = scmp.eq.s32.totalorder %s13, 0
      %p131 = por %p129, %p130
      %p132 = scmp.ne.s32.totalorder %s121, %s124
      %p133 = scmp.eq.s32.totalorder %s18, 1
      %p134 = por %p132, %p133
      %p135 = scmp.ne.s32.totalorder %s124, %s125
      %p136 = scmp.eq.s32.totalorder %s18, 0
      %p137 = por %p135, %p136
      %p138 = scmp.ne.s32.totalorder %s124, %s125
      %p139 = scmp.eq.s32.totalorder %s19, 1
      %p140 = por %p138, %p139
      %p142 = scmp.ne.s32.totalorder %s125, %s141
      %p143 = scmp.eq.s32.totalorder %s19, 0
      %p144 = por %p142, %p143
      %s145 = ssub.s32 %s20, %s32
      %p146 = scmp.eq.s32.totalorder %s145, 0
      %s148 = sadd.s32 %s147, 1
      %s149 = scalar_select %p146, %s147, %s148
      %p152 = pneg %p146
      %p153 = scmp.eq.s32.totalorder %s13, 1
      %p154 = por %p152, %p153
      %p155 = scmp.ne.s32.totalorder %s147, %s150
      %p156 = scmp.eq.s32.totalorder %s13, 0
      %p157 = por %p155, %p156
      %p158 = scmp.ne.s32.totalorder %s147, %s150
      %p159 = scmp.eq.s32.totalorder %s18, 1
      %p160 = por %p158, %p159
      %p161 = scmp.ne.s32.totalorder %s150, %s151
      %p162 = scmp.eq.s32.totalorder %s18, 0
      %p163 = por %p161, %p162
      %p164 = scmp.ne.s32.totalorder %s150, %s151
      %p165 = scmp.eq.s32.totalorder %s19, 1
      %p166 = por %p164, %p165
      %p168 = scmp.ne.s32.totalorder %s151, %s167
      %p169 = scmp.eq.s32.totalorder %s19, 0
      %p170 = por %p168, %p169
      %s171 = smul.u32 %s21, 2
      %s172 = ssub.s32 0, %s171
      %s173 = smul.u32 %s20, %s172
      %s174 = sadd.s32 %s21, %s173
      %s175 = smul.u32 %s28, 2
      %s176 = ssub.s32 0, %s175
      %s177 = smul.u32 %s32, %s176
      %s178 = sadd.s32 %s28, %s177
      %s179 = ssub.s32 %s174, %s178
      %s180 = ssub.s32 %s20, %s32
      %s181 = sor.u32 %s179, %s180
      %p182 = scmp.eq.s32.totalorder %s181, 0
      %s184 = sadd.s32 %s183, 1
      %s185 = scalar_select %p182, %s183, %s184
      %p188 = pneg %p182
      %p189 = scmp.eq.s32.totalorder %s13, 1
      %p190 = por %p188, %p189
      %p191 = scmp.ne.s32.totalorder %s183, %s186
      %p192 = scmp.eq.s32.totalorder %s13, 0
      %p193 = por %p191, %p192
      %p194 = scmp.ne.s32.totalorder %s183, %s186
      %p195 = scmp.eq.s32.totalorder %s18, 1
      %p196 = por %p194, %p195
      %p197 = scmp.ne.s32.totalorder %s186, %s187
      %p198 = scmp.eq.s32.totalorder %s18, 0
      %p199 = por %p197, %p198
      %p200 = scmp.ne.s32.totalorder %s186, %s187
      %p201 = scmp.eq.s32.totalorder %s19, 1
      %p202 = por %p200, %p201
      %p204 = scmp.ne.s32.totalorder %s187, %s203
      %p205 = scmp.eq.s32.totalorder %s19, 0
      %p206 = por %p204, %p205
      %s207 = ssub.s32 %s20, %s32
      %p208 = scmp.eq.s32.totalorder %s207, 0
      %s210 = sadd.s32 %s209, 1
      %s211 = scalar_select %p208, %s209, %s210
      %p214 = pneg %p208
      %p215 = scmp.eq.s32.totalorder %s13, 1
      %p216 = por %p214, %p215
      %p217 = scmp.ne.s32.totalorder %s209, %s212
      %p218 = scmp.eq.s32.totalorder %s13, 0
      %p219 = por %p217, %p218
      %p220 = scmp.ne.s32.totalorder %s209, %s212
      %p221 = scmp.eq.s32.totalorder %s18, 1
      %p222 = por %p220, %p221
      %p223 = scmp.ne.s32.totalorder %s212, %s213
      %p224 = scmp.eq.s32.totalorder %s18, 0
      %p225 = por %p223, %p224
      %p226 = scmp.ne.s32.totalorder %s212, %s213
      %p227 = scmp.eq.s32.totalorder %s19, 1
      %p228 = por %p226, %p227
      %p230 = scmp.ne.s32.totalorder %s213, %s229
      %p231 = scmp.eq.s32.totalorder %s19, 0
      %p232 = por %p230, %p231
      %p233 = scmp.le.s32.totalorder 1, %s13
      %p234 = scmp.lt.s32.totalorder %s13, 3
      %p235 = pnand %p233, %p234
      %p236 = pneg %p235
      // Predicated region
      $region9: #{_encoder_impl.1} parent=5 // pred_check
        _
      $region10: #{_encoder_impl.1} parent=5 // pred_check_branch
        %238 = sbr.rel (%p235) target = $region12
      $region11: #{_encoder_impl.1} parent=5 // pred_region
        %s239 = ssub.s32 %s13, 1
      $region12: #{_encoder_impl.1} parent=5 // pred_fallthru
        _
      %p240 = scmp.lt.s32.totalorder %s13, 2
      // Predicated region
      $region13: #{_encoder_impl.1} parent=5 // pred_check
        %p241 = pneg %p240
      $region14: #{_encoder_impl.1} parent=5 // pred_check_branch
        %243 = sbr.rel (%p241) target = $region16
      $region15: #{_encoder_impl.1} parent=5 // pred_region
        // Predicated region
        $region17: #{_encoder_impl.1} parent=15 // pred_check
          %p244 = pneg %p53
        $region18: #{_encoder_impl.1} parent=15 // pred_check_branch
          %246 = sbr.rel (%p244) target = $region20
        $region19: #{_encoder_impl.1} parent=15 // pred_region
          %s247 = smul.u32 %s21, 2
          %s248 = ssub.s32 0, %s247
          %s249 = smul.u32 %s20, %s248
          %s250 = sadd.s32 %s21, %s249
          %p251 = scmp.lt.s32.totalorder %s250, 0
          %s252 = scalar_select %p251, %s250, 0
          %s253 = smul.addr %s252, 8
          %s254 = scalar_lea.vmem %s0, %s253
          %s255 = smul.u32 %s21, 2
          %s256 = ssub.s32 0, %s255
          %s257 = smul.u32 %s20, %s256
          %s258 = sadd.s32 %s21, %s257
        $region20: #{_encoder_impl.1} parent=15 // pred_fallthru
          _
        // Predicated region
        $region21: #{_encoder_impl.1} parent=15 // pred_check
          %p259 = pneg %p79
        $region22: #{_encoder_impl.1} parent=15 // pred_check_branch
          %261 = sbr.rel (%p259) target = $region24
        $region23: #{_encoder_impl.1} parent=15 // pred_region
          %p262 = scmp.lt.s32.totalorder %s20, 1
          %s263 = scalar_select %p262, %s20, 1
          %s264 = smul.addr %s263, 6
          %s265 = smul.addr %s264, 8
          %s266 = scalar_lea.vmem %s1, %s265
        $region24: #{_encoder_impl.1} parent=15 // pred_fallthru
          _
        // Predicated region
        $region25: #{_encoder_impl.1} parent=15 // pred_check
          %p267 = pneg %p105
        $region26: #{_encoder_impl.1} parent=15 // pred_check_branch
          %269 = sbr.rel (%p267) target = $region28
        $region27: #{_encoder_impl.1} parent=15 // pred_region
          %p270 = scmp.lt.s32.totalorder %s20, 1
          %s271 = scalar_select %p270, %s20, 1
          %s272 = smul.addr %s271, 48
          %s273 = smul.addr %s272, 8
          %s274 = scalar_lea.vmem %s2, %s273
        $region28: #{_encoder_impl.1} parent=15 // pred_fallthru
          _
        // Predicated region
        $region29: #{_encoder_impl.1} parent=15 // pred_check
          %p275 = pneg %p131
        $region30: #{_encoder_impl.1} parent=15 // pred_check_branch
          %277 = sbr.rel (%p275) target = $region32
        $region31: #{_encoder_impl.1} parent=15 // pred_region
          %p278 = scmp.lt.s32.totalorder %s20, 1
          %s279 = scalar_select %p278, %s20, 1
          %s280 = smul.addr %s279, 3
          %s281 = scalar_lea.vmem %s3, %s280
        $region32: #{_encoder_impl.1} parent=15 // pred_fallthru
          _
        // Predicated region
        $region33: #{_encoder_impl.1} parent=15 // pred_check
          %p282 = pneg %p157
        $region34: #{_encoder_impl.1} parent=15 // pred_check_branch
          %284 = sbr.rel (%p282) target = $region36
        $region35: #{_encoder_impl.1} parent=15 // pred_region
          %p285 = scmp.lt.s32.totalorder %s20, 1
          %s286 = scalar_select %p285, %s20, 1
          %s287 = scalar_lea.vmem %s4, %s286
        $region36: #{_encoder_impl.1} parent=15 // pred_fallthru
          _
      $region16: #{_encoder_impl.1} parent=5 // pred_fallthru
        _
      %p288 = scmp.le.s32.totalorder 1, %s13
      %p289 = scmp.lt.s32.totalorder %s13, 3
      %p290 = pnand %p288, %p289
      %p291 = pneg %p290
      // Predicated region
      $region37: #{_encoder_impl.1} parent=5 // pred_check
        _
      $region38: #{_encoder_impl.1} parent=5 // pred_check_branch
        %293 = sbr.rel (%p290) target = $region40
      $region39: #{_encoder_impl.1} parent=5 // pred_region
        %s294 = ssub.s32 %s13, 1
        %s295 = smul.u32 %s23, 2
        %s296 = ssub.s32 0, %s295
        %s297 = smul.u32 %s22, %s296
        %s298 = sadd.s32 %s23, %s297
        %p299 = scmp.lt.s32.totalorder %s298, 0
        %s300 = scalar_select %p299, %s298, 0
        %s301 = smul.addr %s300, 8
        %s302 = scalar_lea.vmem %s0, %s301
        %p303 = pneg %p59
        %p304 = pneg %p56
        %p305 = scmp.lt.s32.totalorder %s22, 1
        %s306 = scalar_select %p305, %s22, 1
        %s307 = smul.addr %s306, 6
        %s308 = smul.addr %s307, 8
        %s309 = scalar_lea.vmem %s1, %s308
        %p310 = pneg %p85
        %p311 = pneg %p82
        %p312 = scmp.lt.s32.totalorder %s22, 1
        %s313 = scalar_select %p312, %s22, 1
        %s314 = smul.addr %s313, 48
        %s315 = smul.addr %s314, 8
        %s316 = scalar_lea.vmem %s2, %s315
        %p317 = pneg %p111
        %p318 = pneg %p108
        %p319 = scmp.lt.s32.totalorder %s22, 1
        %s320 = scalar_select %p319, %s22, 1
        %s321 = smul.addr %s320, 3
        %s322 = scalar_lea.vmem %s3, %s321
        %p323 = pneg %p137
        %p324 = pneg %p134
        %p325 = scmp.lt.s32.totalorder %s22, 1
        %s326 = scalar_select %p325, %s22, 1
        %s327 = scalar_lea.vmem %s4, %s326
        %p328 = pneg %p163
        %p329 = pneg %p160
        %p330 = pneg %p199
        %p331 = pneg %p196
        %s332 = sand.u32 %s186, 1
        %s333 = sand.u32 %s186, 1
        %s334 = smul.addr %s333, 16
        %s335 = scalar_lea.vmem [#allocation5], %s334
        %p336 = pneg %p225
        %p337 = pneg %p222
        %p338 = scmp.lt.s32.totalorder %s22, 1
        %s339 = scalar_select %p338, %s22, 1
        %s340 = smul.addr %s339, 2
        %s341 = scalar_lea.vmem %s6, %s340
        %s342 = smul.u32 %s23, 2
        %s343 = ssub.s32 0, %s342
        %s344 = smul.u32 %s22, %s343
        %s345 = sadd.s32 %s23, %s344
        %p346 = scmp.lt.s32.totalorder %s345, 0
        %s347 = scalar_select %p346, %s345, 0
        %s348 = smul.addr %s347, 8
        %s349 = scalar_lea.vmem %s0, %s348
        %s350 = smul.u32 %s23, 2
        %s351 = ssub.s32 0, %s350
        %s352 = smul.u32 %s22, %s351
        %s353 = sadd.s32 %s23, %s352
        %p354 = scmp.lt.s32.totalorder %s22, 1
        %s355 = scalar_select %p354, %s22, 1
        %s356 = smul.addr %s355, 6
        %s357 = smul.addr %s356, 8
        %s358 = scalar_lea.vmem %s1, %s357
        %p359 = scmp.lt.s32.totalorder %s22, 1
        %s360 = scalar_select %p359, %s22, 1
        %s361 = smul.addr %s360, 48
        %s362 = smul.addr %s361, 8
        %s363 = scalar_lea.vmem %s2, %s362
        %p364 = scmp.lt.s32.totalorder %s22, 1
        %s365 = scalar_select %p364, %s22, 1
        %s366 = smul.addr %s365, 3
        %s367 = scalar_lea.vmem %s3, %s366
        %p368 = scmp.lt.s32.totalorder %s22, 1
        %s369 = scalar_select %p368, %s22, 1
        %s370 = scalar_lea.vmem %s4, %s369
        %s371 = smul.u32 %s23, 2
        %s372 = ssub.s32 0, %s371
        %s373 = smul.u32 %s22, %s372
        %s374 = sadd.s32 %s23, %s373
        %p375 = scmp.lt.s32.totalorder %s22, 1
        %s376 = scalar_select %p375, %s22, 1
        %s377 = smul.addr %s376, 2
        %s378 = scalar_lea.vmem %s6, %s377
        %p379 = scmp.eq.s32.totalorder %s23, 0
        // Predicated region
        $region41: #{_encoder_impl.1} parent=39 // pred_check
          %p380 = pneg %p379
        $region42: #{_encoder_impl.1} parent=39 // pred_check_branch
          %382 = sbr.rel (%p380) target = $region44
        $region43: #{_encoder_impl.1} parent=39 // pred_region
          %383 = vst [vmem:[#allocation4] sm:$0x3] 0.0
        $region44: #{_encoder_impl.1} parent=39 // pred_fallthru
          _
        %v384 = vld [vmem:[%s349] sm:$0xff]
        %v385 = vld [vmem:[%s349 + $0x8] sm:$0xff]
        %v386 = vld [vmem:[%s358] sm:$0xff]
        %v387 = vld [vmem:[%s358 + $0x8] sm:$0xff]
        %v388 = vld [vmem:[%s358 + $0x10] sm:$0xff]
        %v389 = vld [vmem:[%s358 + $0x18] sm:$0xff]
        %v390 = vld [vmem:[%s358 + $0x20] sm:$0xff]
        %v391 = vld [vmem:[%s358 + $0x28] sm:$0xff]
        %v392 = vld [vmem:[%s367] sm:$0x7]
        %v394 = vperm.slane %v392, 0
        %v395 = vperm.slane %v392, 1
        %v396 = vperm.slane %v392, 2
        %vm400 = vcmask 130048
        %v402 = vsel %vm400, %v384, 0
        %v405 = vsel %vm400, %v385, 0
        %407 = vmatpush.msra.mxu0 0.0
        %408 = vmatpush.msra.mxu0 0.0
        %409 = vmatpush.msra.mxu0 0.0
        %410 = vmatpush.msra.mxu0 0.0
        %411 = vmatpush.msra.mxu0 0.0
        %412 = vmatpush.msra.mxu0 0.0
        %413 = vmatpush.msra.mxu0 0.0
        %414 = vmatpush.msra.mxu0 0.0
        %415 = vmatpush.msra.mxu0 0.0
        %416 = vmatpush.msra.mxu0 0.0
        %417 = vmatpush.msra.mxu0 0.0
        %418 = vmatpush.msra.mxu0 0.0
        %419 = vmatpush.msra.mxu0 0.0
        %420 = vmatpush.msra.mxu0 0.0
        %421 = vmatpush.msra.mxu0 %v389
        %422 = vmatpush.msra.mxu0 %v386
        %423 = vmatmul.f32.gmra.mxu0 %v402
        %v424 = vpop.f32.mrf.mxu0
        %v425 = vadd.f32 %v394, %v424
        %426 = vmatmul.f32.gmra.mxu0 %v405
        %v427 = vpop.f32.mrf.mxu0
        %v428 = vadd.f32 %v394, %v427
        %429 = vdwg.mxu0
        %430 = vmatpush.msra.mxu0 0.0
        %431 = vmatpush.msra.mxu0 0.0
        %432 = vmatpush.msra.mxu0 0.0
        %433 = vmatpush.msra.mxu0 0.0
        %434 = vmatpush.msra.mxu0 0.0
        %435 = vmatpush.msra.mxu0 0.0
        %436 = vmatpush.msra.mxu0 0.0
        %437 = vmatpush.msra.mxu0 0.0
        %438 = vmatpush.msra.mxu0 0.0
        %439 = vmatpush.msra.mxu0 0.0
        %440 = vmatpush.msra.mxu0 0.0
        %441 = vmatpush.msra.mxu0 0.0
        %442 = vmatpush.msra.mxu0 0.0
        %443 = vmatpush.msra.mxu0 0.0
        %444 = vmatpush.msra.mxu0 %v390
        %445 = vmatpush.msra.mxu0 %v387
        %446 = vmatmul.f32.gmra.mxu0 %v402
        %v447 = vpop.f32.mrf.mxu0
        %v448 = vadd.f32 %v395, %v447
        %449 = vmatmul.f32.gmra.mxu0 %v405
        %v450 = vpop.f32.mrf.mxu0
        %v451 = vadd.f32 %v395, %v450
        %452 = vdwg.mxu0
        %453 = vmatpush.msra.mxu0 0.0
        %454 = vmatpush.msra.mxu0 0.0
        %455 = vmatpush.msra.mxu0 0.0
        %456 = vmatpush.msra.mxu0 0.0
        %457 = vmatpush.msra.mxu0 0.0
        %458 = vmatpush.msra.mxu0 0.0
        %459 = vmatpush.msra.mxu0 0.0
        %460 = vmatpush.msra.mxu0 0.0
        %461 = vmatpush.msra.mxu0 0.0
        %462 = vmatpush.msra.mxu0 0.0
        %463 = vmatpush.msra.mxu0 0.0
        %464 = vmatpush.msra.mxu0 0.0
        %465 = vmatpush.msra.mxu0 0.0
        %466 = vmatpush.msra.mxu0 0.0
        %467 = vmatpush.msra.mxu0 %v391
        %468 = vmatpush.msra.mxu0 %v388
        %469 = vmatmul.f32.gmra.mxu0 %v402
        %v470 = vpop.f32.mrf.mxu0
        %v471 = vadd.f32 %v396, %v470
        %472 = vmatmul.f32.gmra.mxu0 %v405
        %v473 = vpop.f32.mrf.mxu0
        %v474 = vadd.f32 %v396, %v473
        %475 = vdwg.mxu0
        %v479 = vrot.slane %v448, 7
        %v480 = vrot.slane %v471, 6
        %vm481 = vcmask 1040384
        %v482 = vsel %vm481, %v425, %v479
        %vm483 = vcmask 1041408
        %v484 = vsel %vm483, %v482, %v480
        %vm485 = vcmask 1041409
        %v486 = vsel %vm485, %v425, %v479
        %vm487 = vcmask 1042433
        %v488 = vsel %vm487, %v486, %v480
        %v489 = vrot.slane %v488, 1
        %vm490 = vcmask 1042434
        %v491 = vsel %vm490, %v425, %v479
        %vm492 = vcmask 1043458
        %v493 = vsel %vm492, %v491, %v480
        %v494 = vrot.slane %v493, 2
        %vm495 = vcmask 1043459
        %v496 = vsel %vm495, %v425, %v479
        %vm497 = vcmask 1044483
        %v498 = vsel %vm497, %v496, %v480
        %v499 = vrot.slane %v498, 3
        %vm500 = vcmask 1044484
        %v501 = vsel %vm500, %v425, %v479
        %vm502 = vcmask 1045508
        %v503 = vsel %vm502, %v501, %v480
        %v504 = vrot.slane %v503, 4
        %vm505 = vcmask 1045509
        %v506 = vsel %vm505, %v425, %v479
        %vm507 = vcmask 1046533
        %v508 = vsel %vm507, %v506, %v480
        %v509 = vrot.slane %v508, 5
        %vm510 = vcmask 1046534
        %v511 = vsel %vm510, %v425, %v479
        %vm512 = vcmask 1045504
        %v513 = vsel %vm512, %v480, %v511
        %v514 = vrot.slane %v513, 6
        %vm515 = vcmask 1046528
        %v516 = vsel %vm515, %v479, %v425
        %vm517 = vcmask 1046529
        %v518 = vsel %vm517, %v480, %v516
        %v519 = vrot.slane %v518, 7
        %v528 = vlaneseq
        %vm529 = vcmp.ge.s32.totalorder %v528, 0
        %vm530 = vcmp.lt.s32.totalorder %v528, 384
        %vm531 = vmand %vm529, %vm530
        %532 = vst.msk [vmem:[#allocation2] ss:$2 sm:$0x7] %vm531, %v484
        %s533 = scalar_lea.vmem [#allocation2], 6
        %534 = vst.msk [vmem:[%s533] ss:$2 sm:$0x7] %vm531, %v489
        %s535 = scalar_lea.vmem [#allocation2], 12
        %536 = vst.msk [vmem:[%s535] ss:$2 sm:$0x7] %vm531, %v494
        %s537 = scalar_lea.vmem [#allocation2], 18
        %538 = vst.msk [vmem:[%s537] ss:$2 sm:$0x7] %vm531, %v499
        %s539 = scalar_lea.vmem [#allocation2], 24
        %540 = vst.msk [vmem:[%s539] ss:$2 sm:$0x7] %vm531, %v504
        %s541 = scalar_lea.vmem [#allocation2], 30
        %542 = vst.msk [vmem:[%s541] ss:$2 sm:$0x7] %vm531, %v509
        %s543 = scalar_lea.vmem [#allocation2], 36
        %544 = vst.msk [vmem:[%s543] ss:$2 sm:$0x7] %vm531, %v514
        %s545 = scalar_lea.vmem [#allocation2], 42
        %546 = vst.msk [vmem:[%s545] ss:$2 sm:$0x7] %vm531, %v519
        %v550 = vrot.slane %v451, 7
        %v551 = vrot.slane %v474, 6
        %v552 = vsel %vm481, %v428, %v550
        %v553 = vsel %vm483, %v552, %v551
        %v554 = vsel %vm485, %v428, %v550
        %v555 = vsel %vm487, %v554, %v551
        %v556 = vrot.slane %v555, 1
        %v557 = vsel %vm490, %v428, %v550
        %v558 = vsel %vm492, %v557, %v551
        %v559 = vrot.slane %v558, 2
        %v560 = vsel %vm495, %v428, %v550
        %v561 = vsel %vm497, %v560, %v551
        %v562 = vrot.slane %v561, 3
        %v563 = vsel %vm500, %v428, %v550
        %v564 = vsel %vm502, %v563, %v551
        %v565 = vrot.slane %v564, 4
        %v566 = vsel %vm505, %v428, %v550
        %v567 = vsel %vm507, %v566, %v551
        %v568 = vrot.slane %v567, 5
        %v569 = vsel %vm510, %v428, %v550
        %v570 = vsel %vm512, %v551, %v569
        %v571 = vrot.slane %v570, 6
        %v572 = vsel %vm515, %v550, %v428
        %v573 = vsel %vm517, %v551, %v572
        %v574 = vrot.slane %v573, 7
        %s583 = scalar_lea.vmem [#allocation2], 1
        %584 = vst.msk [vmem:[%s583] ss:$2 sm:$0x7] %vm531, %v553
        %s585 = scalar_lea.vmem [#allocation2], 7
        %586 = vst.msk [vmem:[%s585] ss:$2 sm:$0x7] %vm531, %v556
        %s587 = scalar_lea.vmem [#allocation2], 13
        %588 = vst.msk [vmem:[%s587] ss:$2 sm:$0x7] %vm531, %v559
        %s589 = scalar_lea.vmem [#allocation2], 19
        %590 = vst.msk [vmem:[%s589] ss:$2 sm:$0x7] %vm531, %v562
        %s591 = scalar_lea.vmem [#allocation2], 25
        %592 = vst.msk [vmem:[%s591] ss:$2 sm:$0x7] %vm531, %v565
        %s593 = scalar_lea.vmem [#allocation2], 31
        %594 = vst.msk [vmem:[%s593] ss:$2 sm:$0x7] %vm531, %v568
        %s595 = scalar_lea.vmem [#allocation2], 37
        %596 = vst.msk [vmem:[%s595] ss:$2 sm:$0x7] %vm531, %v571
        %s597 = scalar_lea.vmem [#allocation2], 43
        %598 = vst.msk [vmem:[%s597] ss:$2 sm:$0x7] %vm531, %v574
        %v599 = vld [vmem:[%s363] sm:$0xff]
        %v600 = vld [vmem:[%s363 + $0x8] sm:$0xff]
        %v601 = vld [vmem:[%s363 + $0x10] sm:$0xff]
        %v602 = vld [vmem:[%s363 + $0x18] sm:$0xff]
        %v603 = vld [vmem:[%s363 + $0x20] sm:$0xff]
        %v604 = vld [vmem:[%s363 + $0x28] sm:$0xff]
        %v605 = vld [vmem:[%s363 + $0x30] sm:$0xff]
        %v606 = vld [vmem:[%s363 + $0x38] sm:$0xff]
        %v607 = vld [vmem:[%s363 + $0x40] sm:$0xff]
        %v608 = vld [vmem:[%s363 + $0x48] sm:$0xff]
        %v609 = vld [vmem:[%s363 + $0x50] sm:$0xff]
        %v610 = vld [vmem:[%s363 + $0x58] sm:$0xff]
        %v611 = vld [vmem:[%s363 + $0x60] sm:$0xff]
        %v612 = vld [vmem:[%s363 + $0x68] sm:$0xff]
        %v613 = vld [vmem:[%s363 + $0x70] sm:$0xff]
        %v614 = vld [vmem:[%s363 + $0x78] sm:$0xff]
        %v615 = vld [vmem:[%s363 + $0x80] sm:$0xff]
        %v616 = vld [vmem:[%s363 + $0x88] sm:$0xff]
        %v617 = vld [vmem:[%s363 + $0x90] sm:$0xff]
        %v618 = vld [vmem:[%s363 + $0x98] sm:$0xff]
        %v619 = vld [vmem:[%s363 + $0xa0] sm:$0xff]
        %v620 = vld [vmem:[%s363 + $0xa8] sm:$0xff]
        %v621 = vld [vmem:[%s363 + $0xb0] sm:$0xff]
        %v622 = vld [vmem:[%s363 + $0xb8] sm:$0xff]
        %v623 = vld [vmem:[%s363 + $0xc0] sm:$0xff]
        %v624 = vld [vmem:[%s363 + $0xc8] sm:$0xff]
        %v625 = vld [vmem:[%s363 + $0xd0] sm:$0xff]
        %v626 = vld [vmem:[%s363 + $0xd8] sm:$0xff]
        %v627 = vld [vmem:[%s363 + $0xe0] sm:$0xff]
        %v628 = vld [vmem:[%s363 + $0xe8] sm:$0xff]
        %v629 = vld [vmem:[%s363 + $0xf0] sm:$0xff]
        %v630 = vld [vmem:[%s363 + $0xf8] sm:$0xff]
        %v631 = vld [vmem:[%s363 + $0x100] sm:$0xff]
        %v632 = vld [vmem:[%s363 + $0x108] sm:$0xff]
        %v633 = vld [vmem:[%s363 + $0x110] sm:$0xff]
        %v634 = vld [vmem:[%s363 + $0x118] sm:$0xff]
        %v635 = vld [vmem:[%s363 + $0x120] sm:$0xff]
        %v636 = vld [vmem:[%s363 + $0x128] sm:$0xff]
        %v637 = vld [vmem:[%s363 + $0x130] sm:$0xff]
        %v638 = vld [vmem:[%s363 + $0x138] sm:$0xff]
        %v639 = vld [vmem:[%s363 + $0x140] sm:$0xff]
        %v640 = vld [vmem:[%s363 + $0x148] sm:$0xff]
        %v641 = vld [vmem:[%s363 + $0x150] sm:$0xff]
        %v642 = vld [vmem:[%s363 + $0x158] sm:$0xff]
        %v643 = vld [vmem:[%s363 + $0x160] sm:$0xff]
        %v644 = vld [vmem:[%s363 + $0x168] sm:$0xff]
        %v645 = vld [vmem:[%s363 + $0x170] sm:$0xff]
        %v646 = vld [vmem:[%s363 + $0x178] sm:$0xff]
        %v647 = vld [vmem:[%s370] sm:$0x1]
        %v649 = vperm.slane %v647, 0
        %v651 = vld [vmem:[#allocation4] sm:$0x3]
        %s652 = smul.u32 %s22, 7
        %s653 = smul.u32 %s652, 3
        %s654 = smul.addr %s653, 2
        %s655 = scalar_lea.vmem [#allocation2], %s654
        %v656 = vld [vmem:[%s655] sm:$0x3f]
        %657 = vmatpush.msra.mxu0 %v644
        %658 = vmatpush.msra.mxu0 %v641
        %659 = vmatpush.msra.mxu0 %v638
        %660 = vmatpush.msra.mxu0 %v635
        %661 = vmatpush.msra.mxu0 %v632
        %662 = vmatpush.msra.mxu0 %v629
        %663 = vmatpush.msra.mxu0 %v626
        %664 = vmatpush.msra.mxu0 %v623
        %665 = vmatpush.msra.mxu0 %v620
        %666 = vmatpush.msra.mxu0 %v617
        %667 = vmatpush.msra.mxu0 %v614
        %668 = vmatpush.msra.mxu0 %v611
        %669 = vmatpush.msra.mxu0 %v608
        %670 = vmatpush.msra.mxu0 %v605
        %671 = vmatpush.msra.mxu0 %v602
        %672 = vmatpush.msra.mxu0 %v599
        %673 = vmatmul.f32.gmra.mxu0 %v651
        %v674 = vpop.f32.mrf.mxu0
        %v675 = vadd.f32 0.0, %v674
        %676 = vdwg.mxu0
        %677 = vmatpush.msra.mxu0 %v645
        %678 = vmatpush.msra.mxu0 %v642
        %679 = vmatpush.msra.mxu0 %v639
        %680 = vmatpush.msra.mxu0 %v636
        %681 = vmatpush.msra.mxu0 %v633
        %682 = vmatpush.msra.mxu0 %v630
        %683 = vmatpush.msra.mxu0 %v627
        %684 = vmatpush.msra.mxu0 %v624
        %685 = vmatpush.msra.mxu0 %v621
        %686 = vmatpush.msra.mxu0 %v618
        %687 = vmatpush.msra.mxu0 %v615
        %688 = vmatpush.msra.mxu0 %v612
        %689 = vmatpush.msra.mxu0 %v609
        %690 = vmatpush.msra.mxu0 %v606
        %691 = vmatpush.msra.mxu0 %v603
        %692 = vmatpush.msra.mxu0 %v600
        %693 = vmatmul.f32.gmra.mxu0 %v651
        %v694 = vpop.f32.mrf.mxu0
        %v695 = vadd.f32 0.0, %v694
        %696 = vdwg.mxu0
        %697 = vmatpush.msra.mxu0 %v646
        %698 = vmatpush.msra.mxu0 %v643
        %699 = vmatpush.msra.mxu0 %v640
        %700 = vmatpush.msra.mxu0 %v637
        %701 = vmatpush.msra.mxu0 %v634
        %702 = vmatpush.msra.mxu0 %v631
        %703 = vmatpush.msra.mxu0 %v628
        %704 = vmatpush.msra.mxu0 %v625
        %705 = vmatpush.msra.mxu0 %v622
        %706 = vmatpush.msra.mxu0 %v619
        %707 = vmatpush.msra.mxu0 %v616
        %708 = vmatpush.msra.mxu0 %v613
        %709 = vmatpush.msra.mxu0 %v610
        %710 = vmatpush.msra.mxu0 %v607
        %711 = vmatpush.msra.mxu0 %v604
        %712 = vmatpush.msra.mxu0 %v601
        %713 = vmatmul.f32.gmra.mxu0 %v651
        %v714 = vpop.f32.mrf.mxu0
        %v715 = vadd.f32 0.0, %v714
        %716 = vdwg.mxu0
        %v717 = vadd.f32 %v656, %v675
        %v718 = vxor.u32 %v717, 2147483648
        %v719 = vmul.f32 %v718, 1.442695
        %v720 = vpow.pop %v719
        %v721 = vadd.f32 %v720, 1.0
        %v722 = vrcp.pop %v721
        %v723 = vmul.f32 %v721, %v722
        %v724 = vsub.f32 1.0, %v723
        %v725 = vmul.f32 %v722, %v724
        %v726 = vadd.f32 %v722, %v725
        %vm727 = vweird.f32 %v721
        %vm728 = vweird.f32 %v722
        %vm729 = vmor %vm727, %vm728
        %v730 = vsel %vm729, %v722, %v726
        %v731 = vand.u32 2147483647, %v721
        %vm732 = vcmp.eq.f32.partialorder %v731, 8.507059e+37
        %v733 = vand.u32 %v721, 2147483648
        %v734 = vor.u32 1.1754944e-38, %v733
        %v735 = vsel %vm732, %v734, %v730
        %v736 = vmul.f32 1.0, %v735
        %v738 = vrot.slane %v656, 2
        %v740 = vadd.f32 %v738, %v695
        %v741 = vxor.u32 %v740, 2147483648
        %v742 = vmul.f32 %v741, 1.442695
        %v743 = vpow.pop %v742
        %v744 = vadd.f32 %v743, 1.0
        %v745 = vrcp.pop %v744
        %v746 = vmul.f32 %v744, %v745
        %v747 = vsub.f32 1.0, %v746
        %v748 = vmul.f32 %v745, %v747
        %v749 = vadd.f32 %v745, %v748
        %vm750 = vweird.f32 %v744
        %vm751 = vweird.f32 %v745
        %vm752 = vmor %vm750, %vm751
        %v753 = vsel %vm752, %v745, %v749
        %v754 = vand.u32 2147483647, %v744
        %vm755 = vcmp.eq.f32.partialorder %v754, 8.507059e+37
        %v756 = vand.u32 %v744, 2147483648
        %v757 = vor.u32 1.1754944e-38, %v756
        %v758 = vsel %vm755, %v757, %v753
        %v759 = vmul.f32 1.0, %v758
        %v760 = vadd.f32 %v715, %v649
        %v761 = vmul.f32 %v736, %v760
        %v762 = vrot.slane %v656, 4
        %v764 = vadd.f32 %v762, %v761
        %v765 = vtanh.pop %v764
        %v766 = vsub.f32 1.0, %v759
        %v767 = vmul.f32 %v766, %v765
        %v768 = vmul.f32 %v759, %v651
        %v769 = vadd.f32 %v767, %v768
        %s770 = smul.u32 %s652, 2
        %s771 = scalar_lea.vmem [#allocation3], %s770
        %772 = vst [vmem:[%s771] sm:$0x3] %v769
        %s773 = smul.u32 %s22, 5
        %s774 = sadd.s32 %s773, 1
        %s775 = smul.u32 %s774, 3
        %s776 = smul.addr %s775, 2
        %s777 = scalar_lea.vmem [#allocation2], %s776
        %v778 = vld [vmem:[%s777] sm:$0x3f]
        %779 = vmatpush.msra.mxu0 %v644
        %780 = vmatpush.msra.mxu0 %v641
        %781 = vmatpush.msra.mxu0 %v638
        %782 = vmatpush.msra.mxu0 %v635
        %783 = vmatpush.msra.mxu0 %v632
        %784 = vmatpush.msra.mxu0 %v629
        %785 = vmatpush.msra.mxu0 %v626
        %786 = vmatpush.msra.mxu0 %v623
        %787 = vmatpush.msra.mxu0 %v620
        %788 = vmatpush.msra.mxu0 %v617
        %789 = vmatpush.msra.mxu0 %v614
        %790 = vmatpush.msra.mxu0 %v611
        %791 = vmatpush.msra.mxu0 %v608
        %792 = vmatpush.msra.mxu0 %v605
        %793 = vmatpush.msra.mxu0 %v602
        %794 = vmatpush.msra.mxu0 %v599
        %795 = vmatmul.f32.gmra.mxu0 %v769
        %v796 = vpop.f32.mrf.mxu0
        %v797 = vadd.f32 0.0, %v796
        %798 = vdwg.mxu0
        %799 = vmatpush.msra.mxu0 %v645
        %800 = vmatpush.msra.mxu0 %v642
        %801 = vmatpush.msra.mxu0 %v639
        %802 = vmatpush.msra.mxu0 %v636
        %803 = vmatpush.msra.mxu0 %v633
        %804 = vmatpush.msra.mxu0 %v630
        %805 = vmatpush.msra.mxu0 %v627
        %806 = vmatpush.msra.mxu0 %v624
        %807 = vmatpush.msra.mxu0 %v621
        %808 = vmatpush.msra.mxu0 %v618
        %809 = vmatpush.msra.mxu0 %v615
        %810 = vmatpush.msra.mxu0 %v612
        %811 = vmatpush.msra.mxu0 %v609
        %812 = vmatpush.msra.mxu0 %v606
        %813 = vmatpush.msra.mxu0 %v603
        %814 = vmatpush.msra.mxu0 %v600
        %815 = vmatmul.f32.gmra.mxu0 %v769
        %v816 = vpop.f32.mrf.mxu0
        %v817 = vadd.f32 0.0, %v816
        %818 = vdwg.mxu0
        %819 = vmatpush.msra.mxu0 %v646
        %820 = vmatpush.msra.mxu0 %v643
        %821 = vmatpush.msra.mxu0 %v640
        %822 = vmatpush.msra.mxu0 %v637
        %823 = vmatpush.msra.mxu0 %v634
        %824 = vmatpush.msra.mxu0 %v631
        %825 = vmatpush.msra.mxu0 %v628
        %826 = vmatpush.msra.mxu0 %v625
        %827 = vmatpush.msra.mxu0 %v622
        %828 = vmatpush.msra.mxu0 %v619
        %829 = vmatpush.msra.mxu0 %v616
        %830 = vmatpush.msra.mxu0 %v613
        %831 = vmatpush.msra.mxu0 %v610
        %832 = vmatpush.msra.mxu0 %v607
        %833 = vmatpush.msra.mxu0 %v604
        %834 = vmatpush.msra.mxu0 %v601
        %835 = vmatmul.f32.gmra.mxu0 %v769
        %v836 = vpop.f32.mrf.mxu0
        %v837 = vadd.f32 0.0, %v836
        %838 = vdwg.mxu0
        %v839 = vadd.f32 %v778, %v797
        %v840 = vxor.u32 %v839, 2147483648
        %v841 = vmul.f32 %v840, 1.442695
        %v842 = vpow.pop %v841
        %v843 = vadd.f32 %v842, 1.0
        %v844 = vrcp.pop %v843
        %v845 = vmul.f32 %v843, %v844
        %v846 = vsub.f32 1.0, %v845
        %v847 = vmul.f32 %v844, %v846
        %v848 = vadd.f32 %v844, %v847
        %vm849 = vweird.f32 %v843
        %vm850 = vweird.f32 %v844
        %vm851 = vmor %vm849, %vm850
        %v852 = vsel %vm851, %v844, %v848
        %v853 = vand.u32 2147483647, %v843
        %vm854 = vcmp.eq.f32.partialorder %v853, 8.507059e+37
        %v855 = vand.u32 %v843, 2147483648
        %v856 = vor.u32 1.1754944e-38, %v855
        %v857 = vsel %vm854, %v856, %v852
        %v858 = vmul.f32 1.0, %v857
        %v860 = vrot.slane %v778, 2
        %v862 = vadd.f32 %v860, %v817
        %v863 = vxor.u32 %v862, 2147483648
        %v864 = vmul.f32 %v863, 1.442695
        %v865 = vpow.pop %v864
        %v866 = vadd.f32 %v865, 1.0
        %v867 = vrcp.pop %v866
        %v868 = vmul.f32 %v866, %v867
        %v869 = vsub.f32 1.0, %v868
        %v870 = vmul.f32 %v867, %v869
        %v871 = vadd.f32 %v867, %v870
        %vm872 = vweird.f32 %v866
        %vm873 = vweird.f32 %v867
        %vm874 = vmor %vm872, %vm873
        %v875 = vsel %vm874, %v867, %v871
        %v876 = vand.u32 2147483647, %v866
        %vm877 = vcmp.eq.f32.partialorder %v876, 8.507059e+37
        %v878 = vand.u32 %v866, 2147483648
        %v879 = vor.u32 1.1754944e-38, %v878
        %v880 = vsel %vm877, %v879, %v875
        %v881 = vmul.f32 1.0, %v880
        %v882 = vadd.f32 %v837, %v649
        %v883 = vmul.f32 %v858, %v882
        %v884 = vrot.slane %v778, 4
        %v886 = vadd.f32 %v884, %v883
        %v887 = vtanh.pop %v886
        %v888 = vsub.f32 1.0, %v881
        %v889 = vmul.f32 %v888, %v887
        %v890 = vmul.f32 %v881, %v769
        %v891 = vadd.f32 %v889, %v890
        %s892 = smul.u32 %s774, 2
        %s893 = scalar_lea.vmem [#allocation3], %s892
        %894 = vst [vmem:[%s893] sm:$0x3] %v891
        %s895 = smul.u32 %s22, 3
        %s896 = sadd.s32 %s895, 2
        %s897 = smul.u32 %s896, 3
        %s898 = smul.addr %s897, 2
        %s899 = scalar_lea.vmem [#allocation2], %s898
        %v900 = vld [vmem:[%s899] sm:$0x3f]
        %901 = vmatpush.msra.mxu0 %v644
        %902 = vmatpush.msra.mxu0 %v641
        %903 = vmatpush.msra.mxu0 %v638
        %904 = vmatpush.msra.mxu0 %v635
        %905 = vmatpush.msra.mxu0 %v632
        %906 = vmatpush.msra.mxu0 %v629
        %907 = vmatpush.msra.mxu0 %v626
        %908 = vmatpush.msra.mxu0 %v623
        %909 = vmatpush.msra.mxu0 %v620
        %910 = vmatpush.msra.mxu0 %v617
        %911 = vmatpush.msra.mxu0 %v614
        %912 = vmatpush.msra.mxu0 %v611
        %913 = vmatpush.msra.mxu0 %v608
        %914 = vmatpush.msra.mxu0 %v605
        %915 = vmatpush.msra.mxu0 %v602
        %916 = vmatpush.msra.mxu0 %v599
        %917 = vmatmul.f32.gmra.mxu0 %v891
        %v918 = vpop.f32.mrf.mxu0
        %v919 = vadd.f32 0.0, %v918
        %920 = vdwg.mxu0
        %921 = vmatpush.msra.mxu0 %v645
        %922 = vmatpush.msra.mxu0 %v642
        %923 = vmatpush.msra.mxu0 %v639
        %924 = vmatpush.msra.mxu0 %v636
        %925 = vmatpush.msra.mxu0 %v633
        %926 = vmatpush.msra.mxu0 %v630
        %927 = vmatpush.msra.mxu0 %v627
        %928 = vmatpush.msra.mxu0 %v624
        %929 = vmatpush.msra.mxu0 %v621
        %930 = vmatpush.msra.mxu0 %v618
        %931 = vmatpush.msra.mxu0 %v615
        %932 = vmatpush.msra.mxu0 %v612
        %933 = vmatpush.msra.mxu0 %v609
        %934 = vmatpush.msra.mxu0 %v606
        %935 = vmatpush.msra.mxu0 %v603
        %936 = vmatpush.msra.mxu0 %v600
        %937 = vmatmul.f32.gmra.mxu0 %v891
        %v938 = vpop.f32.mrf.mxu0
        %v939 = vadd.f32 0.0, %v938
        %940 = vdwg.mxu0
        %941 = vmatpush.msra.mxu0 %v646
        %942 = vmatpush.msra.mxu0 %v643
        %943 = vmatpush.msra.mxu0 %v640
        %944 = vmatpush.msra.mxu0 %v637
        %945 = vmatpush.msra.mxu0 %v634
        %946 = vmatpush.msra.mxu0 %v631
        %947 = vmatpush.msra.mxu0 %v628
        %948 = vmatpush.msra.mxu0 %v625
        %949 = vmatpush.msra.mxu0 %v622
        %950 = vmatpush.msra.mxu0 %v619
        %951 = vmatpush.msra.mxu0 %v616
        %952 = vmatpush.msra.mxu0 %v613
        %953 = vmatpush.msra.mxu0 %v610
        %954 = vmatpush.msra.mxu0 %v607
        %955 = vmatpush.msra.mxu0 %v604
        %956 = vmatpush.msra.mxu0 %v601
        %957 = vmatmul.f32.gmra.mxu0 %v891
        %v958 = vpop.f32.mrf.mxu0
        %v959 = vadd.f32 0.0, %v958
        %960 = vdwg.mxu0
        %v961 = vadd.f32 %v900, %v919
        %v962 = vxor.u32 %v961, 2147483648
        %v963 = vmul.f32 %v962, 1.442695
        %v964 = vpow.pop %v963
        %v965 = vadd.f32 %v964, 1.0
        %v966 = vrcp.pop %v965
        %v967 = vmul.f32 %v965, %v966
        %v968 = vsub.f32 1.0, %v967
        %v969 = vmul.f32 %v966, %v968
        %v970 = vadd.f32 %v966, %v969
        %vm971 = vweird.f32 %v965
        %vm972 = vweird.f32 %v966
        %vm973 = vmor %vm971, %vm972
        %v974 = vsel %vm973, %v966, %v970
        %v975 = vand.u32 2147483647, %v965
        %vm976 = vcmp.eq.f32.partialorder %v975, 8.507059e+37
        %v977 = vand.u32 %v965, 2147483648
        %v978 = vor.u32 1.1754944e-38, %v977
        %v979 = vsel %vm976, %v978, %v974
        %v980 = vmul.f32 1.0, %v979
        %v982 = vrot.slane %v900, 2
        %v984 = vadd.f32 %v982, %v939
        %v985 = vxor.u32 %v984, 2147483648
        %v986 = vmul.f32 %v985, 1.442695
        %v987 = vpow.pop %v986
        %v988 = vadd.f32 %v987, 1.0
        %v989 = vrcp.pop %v988
        %v990 = vmul.f32 %v988, %v989
        %v991 = vsub.f32 1.0, %v990
        %v992 = vmul.f32 %v989, %v991
        %v993 = vadd.f32 %v989, %v992
        %vm994 = vweird.f32 %v988
        %vm995 = vweird.f32 %v989
        %vm996 = vmor %vm994, %vm995
        %v997 = vsel %vm996, %v989, %v993
        %v998 = vand.u32 2147483647, %v988
        %vm999 = vcmp.eq.f32.partialorder %v998, 8.507059e+37
        %v1000 = vand.u32 %v988, 2147483648
        %v1001 = vor.u32 1.1754944e-38, %v1000
        %v1002 = vsel %vm999, %v1001, %v997
        %v1003 = vmul.f32 1.0, %v1002
        %v1004 = vadd.f32 %v959, %v649
        %v1005 = vmul.f32 %v980, %v1004
        %v1006 = vrot.slane %v900, 4
        %v1008 = vadd.f32 %v1006, %v1005
        %v1009 = vtanh.pop %v1008
        %v1010 = vsub.f32 1.0, %v1003
        %v1011 = vmul.f32 %v1010, %v1009
        %v1012 = vmul.f32 %v1003, %v891
        %v1013 = vadd.f32 %v1011, %v1012
        %s1014 = smul.u32 %s896, 2
        %s1015 = scalar_lea.vmem [#allocation3], %s1014
        %1016 = vst [vmem:[%s1015] sm:$0x3] %v1013
        %s1017 = sadd.s32 %s22, 3
        %s1018 = smul.u32 %s1017, 3
        %s1019 = smul.addr %s1018, 2
        %s1020 = scalar_lea.vmem [#allocation2], %s1019
        %v1021 = vld [vmem:[%s1020] sm:$0x3f]
        %1022 = vmatpush.msra.mxu0 %v644
        %1023 = vmatpush.msra.mxu0 %v641
        %1024 = vmatpush.msra.mxu0 %v638
        %1025 = vmatpush.msra.mxu0 %v635
        %1026 = vmatpush.msra.mxu0 %v632
        %1027 = vmatpush.msra.mxu0 %v629
        %1028 = vmatpush.msra.mxu0 %v626
        %1029 = vmatpush.msra.mxu0 %v623
        %1030 = vmatpush.msra.mxu0 %v620
        %1031 = vmatpush.msra.mxu0 %v617
        %1032 = vmatpush.msra.mxu0 %v614
        %1033 = vmatpush.msra.mxu0 %v611
        %1034 = vmatpush.msra.mxu0 %v608
        %1035 = vmatpush.msra.mxu0 %v605
        %1036 = vmatpush.msra.mxu0 %v602
        %1037 = vmatpush.msra.mxu0 %v599
        %1038 = vmatmul.f32.gmra.mxu0 %v1013
        %v1039 = vpop.f32.mrf.mxu0
        %v1040 = vadd.f32 0.0, %v1039
        %1041 = vdwg.mxu0
        %1042 = vmatpush.msra.mxu0 %v645
        %1043 = vmatpush.msra.mxu0 %v642
        %1044 = vmatpush.msra.mxu0 %v639
        %1045 = vmatpush.msra.mxu0 %v636
        %1046 = vmatpush.msra.mxu0 %v633
        %1047 = vmatpush.msra.mxu0 %v630
        %1048 = vmatpush.msra.mxu0 %v627
        %1049 = vmatpush.msra.mxu0 %v624
        %1050 = vmatpush.msra.mxu0 %v621
        %1051 = vmatpush.msra.mxu0 %v618
        %1052 = vmatpush.msra.mxu0 %v615
        %1053 = vmatpush.msra.mxu0 %v612
        %1054 = vmatpush.msra.mxu0 %v609
        %1055 = vmatpush.msra.mxu0 %v606
        %1056 = vmatpush.msra.mxu0 %v603
        %1057 = vmatpush.msra.mxu0 %v600
        %1058 = vmatmul.f32.gmra.mxu0 %v1013
        %v1059 = vpop.f32.mrf.mxu0
        %v1060 = vadd.f32 0.0, %v1059
        %1061 = vdwg.mxu0
        %1062 = vmatpush.msra.mxu0 %v646
        %1063 = vmatpush.msra.mxu0 %v643
        %1064 = vmatpush.msra.mxu0 %v640
        %1065 = vmatpush.msra.mxu0 %v637
        %1066 = vmatpush.msra.mxu0 %v634
        %1067 = vmatpush.msra.mxu0 %v631
        %1068 = vmatpush.msra.mxu0 %v628
        %1069 = vmatpush.msra.mxu0 %v625
        %1070 = vmatpush.msra.mxu0 %v622
        %1071 = vmatpush.msra.mxu0 %v619
        %1072 = vmatpush.msra.mxu0 %v616
        %1073 = vmatpush.msra.mxu0 %v613
        %1074 = vmatpush.msra.mxu0 %v610
        %1075 = vmatpush.msra.mxu0 %v607
        %1076 = vmatpush.msra.mxu0 %v604
        %1077 = vmatpush.msra.mxu0 %v601
        %1078 = vmatmul.f32.gmra.mxu0 %v1013
        %v1079 = vpop.f32.mrf.mxu0
        %v1080 = vadd.f32 0.0, %v1079
        %1081 = vdwg.mxu0
        %v1082 = vadd.f32 %v1021, %v1040
        %v1083 = vxor.u32 %v1082, 2147483648
        %v1084 = vmul.f32 %v1083, 1.442695
        %v1085 = vpow.pop %v1084
        %v1086 = vadd.f32 %v1085, 1.0
        %v1087 = vrcp.pop %v1086
        %v1088 = vmul.f32 %v1086, %v1087
        %v1089 = vsub.f32 1.0, %v1088
        %v1090 = vmul.f32 %v1087, %v1089
        %v1091 = vadd.f32 %v1087, %v1090
        %vm1092 = vweird.f32 %v1086
        %vm1093 = vweird.f32 %v1087
        %vm1094 = vmor %vm1092, %vm1093
        %v1095 = vsel %vm1094, %v1087, %v1091
        %v1096 = vand.u32 2147483647, %v1086
        %vm1097 = vcmp.eq.f32.partialorder %v1096, 8.507059e+37
        %v1098 = vand.u32 %v1086, 2147483648
        %v1099 = vor.u32 1.1754944e-38, %v1098
        %v1100 = vsel %vm1097, %v1099, %v1095
        %v1101 = vmul.f32 1.0, %v1100
        %v1103 = vrot.slane %v1021, 2
        %v1105 = vadd.f32 %v1103, %v1060
        %v1106 = vxor.u32 %v1105, 2147483648
        %v1107 = vmul.f32 %v1106, 1.442695
        %v1108 = vpow.pop %v1107
        %v1109 = vadd.f32 %v1108, 1.0
        %v1110 = vrcp.pop %v1109
        %v1111 = vmul.f32 %v1109, %v1110
        %v1112 = vsub.f32 1.0, %v1111
        %v1113 = vmul.f32 %v1110, %v1112
        %v1114 = vadd.f32 %v1110, %v1113
        %vm1115 = vweird.f32 %v1109
        %vm1116 = vweird.f32 %v1110
        %vm1117 = vmor %vm1115, %vm1116
        %v1118 = vsel %vm1117, %v1110, %v1114
        %v1119 = vand.u32 2147483647, %v1109
        %vm1120 = vcmp.eq.f32.partialorder %v1119, 8.507059e+37
        %v1121 = vand.u32 %v1109, 2147483648
        %v1122 = vor.u32 1.1754944e-38, %v1121
        %v1123 = vsel %vm1120, %v1122, %v1118
        %v1124 = vmul.f32 1.0, %v1123
        %v1125 = vadd.f32 %v1080, %v649
        %v1126 = vmul.f32 %v1101, %v1125
        %v1127 = vrot.slane %v1021, 4
        %v1129 = vadd.f32 %v1127, %v1126
        %v1130 = vtanh.pop %v1129
        %v1131 = vsub.f32 1.0, %v1124
        %v1132 = vmul.f32 %v1131, %v1130
        %v1133 = vmul.f32 %v1124, %v1013
        %v1134 = vadd.f32 %v1132, %v1133
        %s1135 = smul.u32 %s1017, 2
        %s1136 = scalar_lea.vmem [#allocation3], %s1135
        %1137 = vst [vmem:[%s1136] sm:$0x3] %v1134
        %s1138 = ssub.s32 4, %s22
        %s1139 = smul.u32 %s1138, 3
        %s1140 = smul.addr %s1139, 2
        %s1141 = scalar_lea.vmem [#allocation2], %s1140
        %v1142 = vld [vmem:[%s1141] sm:$0x3f]
        %1143 = vmatpush.msra.mxu0 %v644
        %1144 = vmatpush.msra.mxu0 %v641
        %1145 = vmatpush.msra.mxu0 %v638
        %1146 = vmatpush.msra.mxu0 %v635
        %1147 = vmatpush.msra.mxu0 %v632
        %1148 = vmatpush.msra.mxu0 %v629
        %1149 = vmatpush.msra.mxu0 %v626
        %1150 = vmatpush.msra.mxu0 %v623
        %1151 = vmatpush.msra.mxu0 %v620
        %1152 = vmatpush.msra.mxu0 %v617
        %1153 = vmatpush.msra.mxu0 %v614
        %1154 = vmatpush.msra.mxu0 %v611
        %1155 = vmatpush.msra.mxu0 %v608
        %1156 = vmatpush.msra.mxu0 %v605
        %1157 = vmatpush.msra.mxu0 %v602
        %1158 = vmatpush.msra.mxu0 %v599
        %1159 = vmatmul.f32.gmra.mxu0 %v1134
        %v1160 = vpop.f32.mrf.mxu0
        %v1161 = vadd.f32 0.0, %v1160
        %1162 = vdwg.mxu0
        %1163 = vmatpush.msra.mxu0 %v645
        %1164 = vmatpush.msra.mxu0 %v642
        %1165 = vmatpush.msra.mxu0 %v639
        %1166 = vmatpush.msra.mxu0 %v636
        %1167 = vmatpush.msra.mxu0 %v633
        %1168 = vmatpush.msra.mxu0 %v630
        %1169 = vmatpush.msra.mxu0 %v627
        %1170 = vmatpush.msra.mxu0 %v624
        %1171 = vmatpush.msra.mxu0 %v621
        %1172 = vmatpush.msra.mxu0 %v618
        %1173 = vmatpush.msra.mxu0 %v615
        %1174 = vmatpush.msra.mxu0 %v612
        %1175 = vmatpush.msra.mxu0 %v609
        %1176 = vmatpush.msra.mxu0 %v606
        %1177 = vmatpush.msra.mxu0 %v603
        %1178 = vmatpush.msra.mxu0 %v600
        %1179 = vmatmul.f32.gmra.mxu0 %v1134
        %v1180 = vpop.f32.mrf.mxu0
        %v1181 = vadd.f32 0.0, %v1180
        %1182 = vdwg.mxu0
        %1183 = vmatpush.msra.mxu0 %v646
        %1184 = vmatpush.msra.mxu0 %v643
        %1185 = vmatpush.msra.mxu0 %v640
        %1186 = vmatpush.msra.mxu0 %v637
        %1187 = vmatpush.msra.mxu0 %v634
        %1188 = vmatpush.msra.mxu0 %v631
        %1189 = vmatpush.msra.mxu0 %v628
        %1190 = vmatpush.msra.mxu0 %v625
        %1191 = vmatpush.msra.mxu0 %v622
        %1192 = vmatpush.msra.mxu0 %v619
        %1193 = vmatpush.msra.mxu0 %v616
        %1194 = vmatpush.msra.mxu0 %v613
        %1195 = vmatpush.msra.mxu0 %v610
        %1196 = vmatpush.msra.mxu0 %v607
        %1197 = vmatpush.msra.mxu0 %v604
        %1198 = vmatpush.msra.mxu0 %v601
        %1199 = vmatmul.f32.gmra.mxu0 %v1134
        %v1200 = vpop.f32.mrf.mxu0
        %v1201 = vadd.f32 0.0, %v1200
        %1202 = vdwg.mxu0
        %v1203 = vadd.f32 %v1142, %v1161
        %v1204 = vxor.u32 %v1203, 2147483648
        %v1205 = vmul.f32 %v1204, 1.442695
        %v1206 = vpow.pop %v1205
        %v1207 = vadd.f32 %v1206, 1.0
        %v1208 = vrcp.pop %v1207
        %v1209 = vmul.f32 %v1207, %v1208
        %v1210 = vsub.f32 1.0, %v1209
        %v1211 = vmul.f32 %v1208, %v1210
        %v1212 = vadd.f32 %v1208, %v1211
        %vm1213 = vweird.f32 %v1207
        %vm1214 = vweird.f32 %v1208
        %vm1215 = vmor %vm1213, %vm1214
        %v1216 = vsel %vm1215, %v1208, %v1212
        %v1217 = vand.u32 2147483647, %v1207
        %vm1218 = vcmp.eq.f32.partialorder %v1217, 8.507059e+37
        %v1219 = vand.u32 %v1207, 2147483648
        %v1220 = vor.u32 1.1754944e-38, %v1219
        %v1221 = vsel %vm1218, %v1220, %v1216
        %v1222 = vmul.f32 1.0, %v1221
        %v1224 = vrot.slane %v1142, 2
        %v1226 = vadd.f32 %v1224, %v1181
        %v1227 = vxor.u32 %v1226, 2147483648
        %v1228 = vmul.f32 %v1227, 1.442695
        %v1229 = vpow.pop %v1228
        %v1230 = vadd.f32 %v1229, 1.0
        %v1231 = vrcp.pop %v1230
        %v1232 = vmul.f32 %v1230, %v1231
        %v1233 = vsub.f32 1.0, %v1232
        %v1234 = vmul.f32 %v1231, %v1233
        %v1235 = vadd.f32 %v1231, %v1234
        %vm1236 = vweird.f32 %v1230
        %vm1237 = vweird.f32 %v1231
        %vm1238 = vmor %vm1236, %vm1237
        %v1239 = vsel %vm1238, %v1231, %v1235
        %v1240 = vand.u32 2147483647, %v1230
        %vm1241 = vcmp.eq.f32.partialorder %v1240, 8.507059e+37
        %v1242 = vand.u32 %v1230, 2147483648
        %v1243 = vor.u32 1.1754944e-38, %v1242
        %v1244 = vsel %vm1241, %v1243, %v1239
        %v1245 = vmul.f32 1.0, %v1244
        %v1246 = vadd.f32 %v1201, %v649
        %v1247 = vmul.f32 %v1222, %v1246
        %v1248 = vrot.slane %v1142, 4
        %v1250 = vadd.f32 %v1248, %v1247
        %v1251 = vtanh.pop %v1250
        %v1252 = vsub.f32 1.0, %v1245
        %v1253 = vmul.f32 %v1252, %v1251
        %v1254 = vmul.f32 %v1245, %v1134
        %v1255 = vadd.f32 %v1253, %v1254
        %s1256 = smul.u32 %s1138, 2
        %s1257 = scalar_lea.vmem [#allocation3], %s1256
        %1258 = vst [vmem:[%s1257] sm:$0x3] %v1255
        %s1259 = smul.u32 %s22, 4294967293
        %s1260 = sadd.s32 %s1259, 5
        %s1261 = smul.u32 %s1260, 3
        %s1262 = smul.addr %s1261, 2
        %s1263 = scalar_lea.vmem [#allocation2], %s1262
        %v1264 = vld [vmem:[%s1263] sm:$0x3f]
        %1265 = vmatpush.msra.mxu0 %v644
        %1266 = vmatpush.msra.mxu0 %v641
        %1267 = vmatpush.msra.mxu0 %v638
        %1268 = vmatpush.msra.mxu0 %v635
        %1269 = vmatpush.msra.mxu0 %v632
        %1270 = vmatpush.msra.mxu0 %v629
        %1271 = vmatpush.msra.mxu0 %v626
        %1272 = vmatpush.msra.mxu0 %v623
        %1273 = vmatpush.msra.mxu0 %v620
        %1274 = vmatpush.msra.mxu0 %v617
        %1275 = vmatpush.msra.mxu0 %v614
        %1276 = vmatpush.msra.mxu0 %v611
        %1277 = vmatpush.msra.mxu0 %v608
        %1278 = vmatpush.msra.mxu0 %v605
        %1279 = vmatpush.msra.mxu0 %v602
        %1280 = vmatpush.msra.mxu0 %v599
        %1281 = vmatmul.f32.gmra.mxu0 %v1255
        %v1282 = vpop.f32.mrf.mxu0
        %v1283 = vadd.f32 0.0, %v1282
        %1284 = vdwg.mxu0
        %1285 = vmatpush.msra.mxu0 %v645
        %1286 = vmatpush.msra.mxu0 %v642
        %1287 = vmatpush.msra.mxu0 %v639
        %1288 = vmatpush.msra.mxu0 %v636
        %1289 = vmatpush.msra.mxu0 %v633
        %1290 = vmatpush.msra.mxu0 %v630
        %1291 = vmatpush.msra.mxu0 %v627
        %1292 = vmatpush.msra.mxu0 %v624
        %1293 = vmatpush.msra.mxu0 %v621
        %1294 = vmatpush.msra.mxu0 %v618
        %1295 = vmatpush.msra.mxu0 %v615
        %1296 = vmatpush.msra.mxu0 %v612
        %1297 = vmatpush.msra.mxu0 %v609
        %1298 = vmatpush.msra.mxu0 %v606
        %1299 = vmatpush.msra.mxu0 %v603
        %1300 = vmatpush.msra.mxu0 %v600
        %1301 = vmatmul.f32.gmra.mxu0 %v1255
        %v1302 = vpop.f32.mrf.mxu0
        %v1303 = vadd.f32 0.0, %v1302
        %1304 = vdwg.mxu0
        %1305 = vmatpush.msra.mxu0 %v646
        %1306 = vmatpush.msra.mxu0 %v643
        %1307 = vmatpush.msra.mxu0 %v640
        %1308 = vmatpush.msra.mxu0 %v637
        %1309 = vmatpush.msra.mxu0 %v634
        %1310 = vmatpush.msra.mxu0 %v631
        %1311 = vmatpush.msra.mxu0 %v628
        %1312 = vmatpush.msra.mxu0 %v625
        %1313 = vmatpush.msra.mxu0 %v622
        %1314 = vmatpush.msra.mxu0 %v619
        %1315 = vmatpush.msra.mxu0 %v616
        %1316 = vmatpush.msra.mxu0 %v613
        %1317 = vmatpush.msra.mxu0 %v610
        %1318 = vmatpush.msra.mxu0 %v607
        %1319 = vmatpush.msra.mxu0 %v604
        %1320 = vmatpush.msra.mxu0 %v601
        %1321 = vmatmul.f32.gmra.mxu0 %v1255
        %v1322 = vpop.f32.mrf.mxu0
        %v1323 = vadd.f32 0.0, %v1322
        %1324 = vdwg.mxu0
        %v1325 = vadd.f32 %v1264, %v1283
        %v1326 = vxor.u32 %v1325, 2147483648
        %v1327 = vmul.f32 %v1326, 1.442695
        %v1328 = vpow.pop %v1327
        %v1329 = vadd.f32 %v1328, 1.0
        %v1330 = vrcp.pop %v1329
        %v1331 = vmul.f32 %v1329, %v1330
        %v1332 = vsub.f32 1.0, %v1331
        %v1333 = vmul.f32 %v1330, %v1332
        %v1334 = vadd.f32 %v1330, %v1333
        %vm1335 = vweird.f32 %v1329
        %vm1336 = vweird.f32 %v1330
        %vm1337 = vmor %vm1335, %vm1336
        %v1338 = vsel %vm1337, %v1330, %v1334
        %v1339 = vand.u32 2147483647, %v1329
        %vm1340 = vcmp.eq.f32.partialorder %v1339, 8.507059e+37
        %v1341 = vand.u32 %v1329, 2147483648
        %v1342 = vor.u32 1.1754944e-38, %v1341
        %v1343 = vsel %vm1340, %v1342, %v1338
        %v1344 = vmul.f32 1.0, %v1343
        %v1346 = vrot.slane %v1264, 2
        %v1348 = vadd.f32 %v1346, %v1303
        %v1349 = vxor.u32 %v1348, 2147483648
        %v1350 = vmul.f32 %v1349, 1.442695
        %v1351 = vpow.pop %v1350
        %v1352 = vadd.f32 %v1351, 1.0
        %v1353 = vrcp.pop %v1352
        %v1354 = vmul.f32 %v1352, %v1353
        %v1355 = vsub.f32 1.0, %v1354
        %v1356 = vmul.f32 %v1353, %v1355
        %v1357 = vadd.f32 %v1353, %v1356
        %vm1358 = vweird.f32 %v1352
        %vm1359 = vweird.f32 %v1353
        %vm1360 = vmor %vm1358, %vm1359
        %v1361 = vsel %vm1360, %v1353, %v1357
        %v1362 = vand.u32 2147483647, %v1352
        %vm1363 = vcmp.eq.f32.partialorder %v1362, 8.507059e+37
        %v1364 = vand.u32 %v1352, 2147483648
        %v1365 = vor.u32 1.1754944e-38, %v1364
        %v1366 = vsel %vm1363, %v1365, %v1361
        %v1367 = vmul.f32 1.0, %v1366
        %v1368 = vadd.f32 %v1323, %v649
        %v1369 = vmul.f32 %v1344, %v1368
        %v1370 = vrot.slane %v1264, 4
        %v1372 = vadd.f32 %v1370, %v1369
        %v1373 = vtanh.pop %v1372
        %v1374 = vsub.f32 1.0, %v1367
        %v1375 = vmul.f32 %v1374, %v1373
        %v1376 = vmul.f32 %v1367, %v1255
        %v1377 = vadd.f32 %v1375, %v1376
        %s1378 = smul.u32 %s1260, 2
        %s1379 = scalar_lea.vmem [#allocation3], %s1378
        %1380 = vst [vmem:[%s1379] sm:$0x3] %v1377
        %s1381 = smul.u32 %s22, 4294967291
        %s1382 = sadd.s32 %s1381, 6
        %s1383 = smul.u32 %s1382, 3
        %s1384 = smul.addr %s1383, 2
        %s1385 = scalar_lea.vmem [#allocation2], %s1384
        %v1386 = vld [vmem:[%s1385] sm:$0x3f]
        %1387 = vmatpush.msra.mxu0 %v644
        %1388 = vmatpush.msra.mxu0 %v641
        %1389 = vmatpush.msra.mxu0 %v638
        %1390 = vmatpush.msra.mxu0 %v635
        %1391 = vmatpush.msra.mxu0 %v632
        %1392 = vmatpush.msra.mxu0 %v629
        %1393 = vmatpush.msra.mxu0 %v626
        %1394 = vmatpush.msra.mxu0 %v623
        %1395 = vmatpush.msra.mxu0 %v620
        %1396 = vmatpush.msra.mxu0 %v617
        %1397 = vmatpush.msra.mxu0 %v614
        %1398 = vmatpush.msra.mxu0 %v611
        %1399 = vmatpush.msra.mxu0 %v608
        %1400 = vmatpush.msra.mxu0 %v605
        %1401 = vmatpush.msra.mxu0 %v602
        %1402 = vmatpush.msra.mxu0 %v599
        %1403 = vmatmul.f32.gmra.mxu0 %v1377
        %v1404 = vpop.f32.mrf.mxu0
        %v1405 = vadd.f32 0.0, %v1404
        %1406 = vdwg.mxu0
        %1407 = vmatpush.msra.mxu0 %v645
        %1408 = vmatpush.msra.mxu0 %v642
        %1409 = vmatpush.msra.mxu0 %v639
        %1410 = vmatpush.msra.mxu0 %v636
        %1411 = vmatpush.msra.mxu0 %v633
        %1412 = vmatpush.msra.mxu0 %v630
        %1413 = vmatpush.msra.mxu0 %v627
        %1414 = vmatpush.msra.mxu0 %v624
        %1415 = vmatpush.msra.mxu0 %v621
        %1416 = vmatpush.msra.mxu0 %v618
        %1417 = vmatpush.msra.mxu0 %v615
        %1418 = vmatpush.msra.mxu0 %v612
        %1419 = vmatpush.msra.mxu0 %v609
        %1420 = vmatpush.msra.mxu0 %v606
        %1421 = vmatpush.msra.mxu0 %v603
        %1422 = vmatpush.msra.mxu0 %v600
        %1423 = vmatmul.f32.gmra.mxu0 %v1377
        %v1424 = vpop.f32.mrf.mxu0
        %v1425 = vadd.f32 0.0, %v1424
        %1426 = vdwg.mxu0
        %1427 = vmatpush.msra.mxu0 %v646
        %1428 = vmatpush.msra.mxu0 %v643
        %1429 = vmatpush.msra.mxu0 %v640
        %1430 = vmatpush.msra.mxu0 %v637
        %1431 = vmatpush.msra.mxu0 %v634
        %1432 = vmatpush.msra.mxu0 %v631
        %1433 = vmatpush.msra.mxu0 %v628
        %1434 = vmatpush.msra.mxu0 %v625
        %1435 = vmatpush.msra.mxu0 %v622
        %1436 = vmatpush.msra.mxu0 %v619
        %1437 = vmatpush.msra.mxu0 %v616
        %1438 = vmatpush.msra.mxu0 %v613
        %1439 = vmatpush.msra.mxu0 %v610
        %1440 = vmatpush.msra.mxu0 %v607
        %1441 = vmatpush.msra.mxu0 %v604
        %1442 = vmatpush.msra.mxu0 %v601
        %1443 = vmatmul.f32.gmra.mxu0 %v1377
        %v1444 = vpop.f32.mrf.mxu0
        %v1445 = vadd.f32 0.0, %v1444
        %1446 = vdwg.mxu0
        %v1447 = vadd.f32 %v1386, %v1405
        %v1448 = vxor.u32 %v1447, 2147483648
        %v1449 = vmul.f32 %v1448, 1.442695
        %v1450 = vpow.pop %v1449
        %v1451 = vadd.f32 %v1450, 1.0
        %v1452 = vrcp.pop %v1451
        %v1453 = vmul.f32 %v1451, %v1452
        %v1454 = vsub.f32 1.0, %v1453
        %v1455 = vmul.f32 %v1452, %v1454
        %v1456 = vadd.f32 %v1452, %v1455
        %vm1457 = vweird.f32 %v1451
        %vm1458 = vweird.f32 %v1452
        %vm1459 = vmor %vm1457, %vm1458
        %v1460 = vsel %vm1459, %v1452, %v1456
        %v1461 = vand.u32 2147483647, %v1451
        %vm1462 = vcmp.eq.f32.partialorder %v1461, 8.507059e+37
        %v1463 = vand.u32 %v1451, 2147483648
        %v1464 = vor.u32 1.1754944e-38, %v1463
        %v1465 = vsel %vm1462, %v1464, %v1460
        %v1466 = vmul.f32 1.0, %v1465
        %v1468 = vrot.slane %v1386, 2
        %v1470 = vadd.f32 %v1468, %v1425
        %v1471 = vxor.u32 %v1470, 2147483648
        %v1472 = vmul.f32 %v1471, 1.442695
        %v1473 = vpow.pop %v1472
        %v1474 = vadd.f32 %v1473, 1.0
        %v1475 = vrcp.pop %v1474
        %v1476 = vmul.f32 %v1474, %v1475
        %v1477 = vsub.f32 1.0, %v1476
        %v1478 = vmul.f32 %v1475, %v1477
        %v1479 = vadd.f32 %v1475, %v1478
        %vm1480 = vweird.f32 %v1474
        %vm1481 = vweird.f32 %v1475
        %vm1482 = vmor %vm1480, %vm1481
        %v1483 = vsel %vm1482, %v1475, %v1479
        %v1484 = vand.u32 2147483647, %v1474
        %vm1485 = vcmp.eq.f32.partialorder %v1484, 8.507059e+37
        %v1486 = vand.u32 %v1474, 2147483648
        %v1487 = vor.u32 1.1754944e-38, %v1486
        %v1488 = vsel %vm1485, %v1487, %v1483
        %v1489 = vmul.f32 1.0, %v1488
        %v1490 = vadd.f32 %v1445, %v649
        %v1491 = vmul.f32 %v1466, %v1490
        %v1492 = vrot.slane %v1386, 4
        %v1494 = vadd.f32 %v1492, %v1491
        %v1495 = vtanh.pop %v1494
        %v1496 = vsub.f32 1.0, %v1489
        %v1497 = vmul.f32 %v1496, %v1495
        %v1498 = vmul.f32 %v1489, %v1377
        %v1499 = vadd.f32 %v1497, %v1498
        %s1500 = smul.u32 %s1382, 2
        %s1501 = scalar_lea.vmem [#allocation3], %s1500
        %1502 = vst [vmem:[%s1501] sm:$0x3] %v1499
        %s1503 = smul.u32 %s22, 4294967289
        %s1504 = sadd.s32 %s1503, 7
        %s1505 = smul.u32 %s1504, 3
        %s1506 = smul.addr %s1505, 2
        %s1507 = scalar_lea.vmem [#allocation2], %s1506
        %v1508 = vld [vmem:[%s1507] sm:$0x3f]
        %1509 = vmatpush.msra.mxu0 %v644
        %1510 = vmatpush.msra.mxu0 %v641
        %1511 = vmatpush.msra.mxu0 %v638
        %1512 = vmatpush.msra.mxu0 %v635
        %1513 = vmatpush.msra.mxu0 %v632
        %1514 = vmatpush.msra.mxu0 %v629
        %1515 = vmatpush.msra.mxu0 %v626
        %1516 = vmatpush.msra.mxu0 %v623
        %1517 = vmatpush.msra.mxu0 %v620
        %1518 = vmatpush.msra.mxu0 %v617
        %1519 = vmatpush.msra.mxu0 %v614
        %1520 = vmatpush.msra.mxu0 %v611
        %1521 = vmatpush.msra.mxu0 %v608
        %1522 = vmatpush.msra.mxu0 %v605
        %1523 = vmatpush.msra.mxu0 %v602
        %1524 = vmatpush.msra.mxu0 %v599
        %1525 = vmatmul.f32.gmra.mxu0 %v1499
        %v1526 = vpop.f32.mrf.mxu0
        %v1527 = vadd.f32 0.0, %v1526
        %1528 = vdwg.mxu0
        %1529 = vmatpush.msra.mxu0 %v645
        %1530 = vmatpush.msra.mxu0 %v642
        %1531 = vmatpush.msra.mxu0 %v639
        %1532 = vmatpush.msra.mxu0 %v636
        %1533 = vmatpush.msra.mxu0 %v633
        %1534 = vmatpush.msra.mxu0 %v630
        %1535 = vmatpush.msra.mxu0 %v627
        %1536 = vmatpush.msra.mxu0 %v624
        %1537 = vmatpush.msra.mxu0 %v621
        %1538 = vmatpush.msra.mxu0 %v618
        %1539 = vmatpush.msra.mxu0 %v615
        %1540 = vmatpush.msra.mxu0 %v612
        %1541 = vmatpush.msra.mxu0 %v609
        %1542 = vmatpush.msra.mxu0 %v606
        %1543 = vmatpush.msra.mxu0 %v603
        %1544 = vmatpush.msra.mxu0 %v600
        %1545 = vmatmul.f32.gmra.mxu0 %v1499
        %v1546 = vpop.f32.mrf.mxu0
        %v1547 = vadd.f32 0.0, %v1546
        %1548 = vdwg.mxu0
        %1549 = vmatpush.msra.mxu0 %v646
        %1550 = vmatpush.msra.mxu0 %v643
        %1551 = vmatpush.msra.mxu0 %v640
        %1552 = vmatpush.msra.mxu0 %v637
        %1553 = vmatpush.msra.mxu0 %v634
        %1554 = vmatpush.msra.mxu0 %v631
        %1555 = vmatpush.msra.mxu0 %v628
        %1556 = vmatpush.msra.mxu0 %v625
        %1557 = vmatpush.msra.mxu0 %v622
        %1558 = vmatpush.msra.mxu0 %v619
        %1559 = vmatpush.msra.mxu0 %v616
        %1560 = vmatpush.msra.mxu0 %v613
        %1561 = vmatpush.msra.mxu0 %v610
        %1562 = vmatpush.msra.mxu0 %v607
        %1563 = vmatpush.msra.mxu0 %v604
        %1564 = vmatpush.msra.mxu0 %v601
        %1565 = vmatmul.f32.gmra.mxu0 %v1499
        %v1566 = vpop.f32.mrf.mxu0
        %v1567 = vadd.f32 0.0, %v1566
        %1568 = vdwg.mxu0
        %v1569 = vadd.f32 %v1508, %v1527
        %v1570 = vxor.u32 %v1569, 2147483648
        %v1571 = vmul.f32 %v1570, 1.442695
        %v1572 = vpow.pop %v1571
        %v1573 = vadd.f32 %v1572, 1.0
        %v1574 = vrcp.pop %v1573
        %v1575 = vmul.f32 %v1573, %v1574
        %v1576 = vsub.f32 1.0, %v1575
        %v1577 = vmul.f32 %v1574, %v1576
        %v1578 = vadd.f32 %v1574, %v1577
        %vm1579 = vweird.f32 %v1573
        %vm1580 = vweird.f32 %v1574
        %vm1581 = vmor %vm1579, %vm1580
        %v1582 = vsel %vm1581, %v1574, %v1578
        %v1583 = vand.u32 2147483647, %v1573
        %vm1584 = vcmp.eq.f32.partialorder %v1583, 8.507059e+37
        %v1585 = vand.u32 %v1573, 2147483648
        %v1586 = vor.u32 1.1754944e-38, %v1585
        %v1587 = vsel %vm1584, %v1586, %v1582
        %v1588 = vmul.f32 1.0, %v1587
        %v1590 = vrot.slane %v1508, 2
        %v1592 = vadd.f32 %v1590, %v1547
        %v1593 = vxor.u32 %v1592, 2147483648
        %v1594 = vmul.f32 %v1593, 1.442695
        %v1595 = vpow.pop %v1594
        %v1596 = vadd.f32 %v1595, 1.0
        %v1597 = vrcp.pop %v1596
        %v1598 = vmul.f32 %v1596, %v1597
        %v1599 = vsub.f32 1.0, %v1598
        %v1600 = vmul.f32 %v1597, %v1599
        %v1601 = vadd.f32 %v1597, %v1600
        %vm1602 = vweird.f32 %v1596
        %vm1603 = vweird.f32 %v1597
        %vm1604 = vmor %vm1602, %vm1603
        %v1605 = vsel %vm1604, %v1597, %v1601
        %v1606 = vand.u32 2147483647, %v1596
        %vm1607 = vcmp.eq.f32.partialorder %v1606, 8.507059e+37
        %v1608 = vand.u32 %v1596, 2147483648
        %v1609 = vor.u32 1.1754944e-38, %v1608
        %v1610 = vsel %vm1607, %v1609, %v1605
        %v1611 = vmul.f32 1.0, %v1610
        %v1612 = vadd.f32 %v1567, %v649
        %v1613 = vmul.f32 %v1588, %v1612
        %v1614 = vrot.slane %v1508, 4
        %v1616 = vadd.f32 %v1614, %v1613
        %v1617 = vtanh.pop %v1616
        %v1618 = vsub.f32 1.0, %v1611
        %v1619 = vmul.f32 %v1618, %v1617
        %v1620 = vmul.f32 %v1611, %v1499
        %v1621 = vadd.f32 %v1619, %v1620
        %s1622 = smul.u32 %s1504, 2
        %s1623 = scalar_lea.vmem [#allocation3], %s1622
        %1624 = vst [vmem:[%s1623] sm:$0x3] %v1621
        %1625 = vst [vmem:[#allocation4] sm:$0x3] %v1621
        %1626 = vst [vmem:[%s378] sm:$0x3] %v1621
        %v1627 = vld [vmem:[#allocation3] sm:$0x1]
        %v1628 = vld [vmem:[#allocation3 + $0x2] sm:$0x1]
        %v1629 = vld [vmem:[#allocation3 + $0x4] sm:$0x1]
        %v1630 = vld [vmem:[#allocation3 + $0x6] sm:$0x1]
        %v1631 = vld [vmem:[#allocation3 + $0x8] sm:$0x1]
        %v1632 = vld [vmem:[#allocation3 + $0xa] sm:$0x1]
        %v1633 = vld [vmem:[#allocation3 + $0xc] sm:$0x1]
        %v1634 = vld [vmem:[#allocation3 + $0xe] sm:$0x1]
        %v1643 = vrot.slane %v1628, 7
        %v1644 = vsel %vm485, %v1643, %v1627
        %v1645 = vrot.slane %v1629, 6
        %v1646 = vsel %vm490, %v1645, %v1644
        %v1647 = vrot.slane %v1630, 5
        %v1648 = vsel %vm495, %v1647, %v1646
        %v1649 = vrot.slane %v1631, 4
        %v1650 = vsel %vm500, %v1649, %v1648
        %v1651 = vrot.slane %v1632, 3
        %v1652 = vsel %vm505, %v1651, %v1650
        %v1653 = vrot.slane %v1633, 2
        %v1654 = vsel %vm510, %v1653, %v1652
        %v1655 = vrot.slane %v1634, 1
        %vm1656 = vcmask 1047559
        %v1657 = vsel %vm1656, %v1655, %v1654
        %1659 = vst [vmem:[%s335] sm:$0xff] %v1657
        %v1660 = vld [vmem:[#allocation3 + $0x1] sm:$0x1]
        %v1661 = vld [vmem:[#allocation3 + $0x3] sm:$0x1]
        %v1662 = vld [vmem:[#allocation3 + $0x5] sm:$0x1]
        %v1663 = vld [vmem:[#allocation3 + $0x7] sm:$0x1]
        %v1664 = vld [vmem:[#allocation3 + $0x9] sm:$0x1]
        %v1665 = vld [vmem:[#allocation3 + $0xb] sm:$0x1]
        %v1666 = vld [vmem:[#allocation3 + $0xd] sm:$0x1]
        %v1667 = vld [vmem:[#allocation3 + $0xf] sm:$0x1]
        %v1676 = vrot.slane %v1661, 7
        %v1677 = vsel %vm485, %v1676, %v1660
        %v1678 = vrot.slane %v1662, 6
        %v1679 = vsel %vm490, %v1678, %v1677
        %v1680 = vrot.slane %v1663, 5
        %v1681 = vsel %vm495, %v1680, %v1679
        %v1682 = vrot.slane %v1664, 4
        %v1683 = vsel %vm500, %v1682, %v1681
        %v1684 = vrot.slane %v1665, 3
        %v1685 = vsel %vm505, %v1684, %v1683
        %v1686 = vrot.slane %v1666, 2
        %v1687 = vsel %vm510, %v1686, %v1685
        %v1688 = vrot.slane %v1667, 1
        %v1689 = vsel %vm1656, %v1688, %v1687
        %s1691 = scalar_lea.vmem %s335, 8 [#allocation5]
        %1692 = vst [vmem:[%s1691] sm:$0xff] %v1689
        %s1693 = sand.u32 %s186, 1
        %s1694 = sand.u32 %s186, 1
        %s1695 = smul.addr %s1694, 16
        %s1696 = scalar_lea.vmem [#allocation5], %s1695
        %p1697 = scmp.lt.s32.totalorder %s22, 1
        %s1698 = scalar_select %p1697, %s22, 1
        %s1699 = smul.addr %s1698, 2
        %s1700 = scalar_lea.vmem %s6, %s1699
        // Predicated region
        $region45: #{_encoder_impl.1} parent=39 // pred_check
          %p1701 = pneg %p196
        $region46: #{_encoder_impl.1} parent=39 // pred_check_branch
          %1703 = sbr.rel (%p1701) target = $region48
        $region47: #{_encoder_impl.1} parent=39 // pred_region
          %s1704 = smul.u32 %s23, 2
          %s1705 = ssub.s32 0, %s1704
          %s1706 = smul.u32 %s22, %s1705
          %s1707 = sadd.s32 %s23, %s1706
          %s1708 = smul.addr %s1707, 2
          %s1709 = sadd.s32 %s22, %s1708
          %s1710 = smul.addr %s1709, 8
          %s1711 = scalar_lea.vmem %s5, %s1710
          // Predicated region
          $region49: #{_encoder_impl.1} parent=47 // pred_check
            _
          $region50: #{_encoder_impl.1} parent=47 // pred_check_branch
            %1713 = sbr.rel (0) target = $region52
          $region51: #{_encoder_impl.1} parent=47 // pred_region
            // Predicated region
            $region53: #{_encoder_impl.1} parent=51 // pred_check
              _
            $region54: #{_encoder_impl.1} parent=51 // pred_check_branch
              %1715 = sbr.rel (0) target = $region56
            $region55: #{_encoder_impl.1} parent=51 // pred_region
              // Predicated region
              $region68: #{_encoder_impl.1} parent=55 // pred_check
                _
              $region69: #{_encoder_impl.1} parent=55 // pred_check_branch
                %1733 = sbr.rel (0) target = $region71
              $region70: #{_encoder_impl.1} parent=55 // pred_region
                loop: start=0, step=1, limit=1
                $region72: #{_encoder_impl.1} parent=70 // loop_pre_header
                  _
                $region73: #{_encoder_impl.1} parent=70 // loop_header
                  %s1735 = sphi 0, %s1739
                  %p1736 = scmp.ge.s32.totalorder %s1735, 1
                  %s1740 = sphi %s1696, %s1696
                  %s1741 = sphi %s1711, %s1711
                $region74: #{_encoder_impl.1} parent=70 // loop_header_branch
                  %1738 = sbr.rel (%p1736) target = $region78
                $region75: #{_encoder_impl.1} parent=70 // loop_body
                  %v1742 = vld [vmem:[%s1740] sm:$0xff]
                  %1743 = vst [vmem:[%s1741] sm:$0xff] %v1742
                  %v1744 = vld [vmem:[%s1740 + $0x8] sm:$0xff]
                  %1745 = vst [vmem:[%s1741 + $0x10] sm:$0xff] %v1744
                $region76: #{_encoder_impl.1} parent=70 // loop_footer
                  %s1739 = sadd.s32 1, %s1735
                $region77: #{_encoder_impl.1} parent=70 // loop_footer_branch
                  %1734 = sbr.rel target = $region73
                $region78: #{_encoder_impl.1} parent=70 // loop_exit
                  _
              $region71: #{_encoder_impl.1} parent=55 // pred_fallthru
                _
              // Predicated region
              $region79: #{_encoder_impl.1} parent=55 // pred_check
                _
              $region80: #{_encoder_impl.1} parent=55 // pred_check_branch
                %1747 = sbr.rel target = $region82
              $region81: #{_encoder_impl.1} parent=55 // pred_region
                _
              $region82: #{_encoder_impl.1} parent=55 // pred_fallthru
                _
            $region56: #{_encoder_impl.1} parent=51 // pred_fallthru
              _
            // Predicated region
            $region57: #{_encoder_impl.1} parent=51 // pred_check
              _
            $region58: #{_encoder_impl.1} parent=51 // pred_check_branch
              %1717 = sbr.rel target = $region60
            $region59: #{_encoder_impl.1} parent=51 // pred_region
              %s1719 = ssub.s32 256, 1
              loop: start=0, step=1, limit=1
              $region61: #{_encoder_impl.1} parent=59 // loop_pre_header
                _
              $region62: #{_encoder_impl.1} parent=59 // loop_header
                %s1721 = sphi 0, %s1725
                %p1722 = scmp.ge.s32.totalorder %s1721, 1
                %s1726 = sphi %s1696, %s1696
                %s1727 = sphi %s1711, %s1711
              $region63: #{_encoder_impl.1} parent=59 // loop_header_branch
                %1724 = sbr.rel (%p1722) target = $region67
              $region64: #{_encoder_impl.1} parent=59 // loop_body
                %v1728 = vld [vmem:[%s1726] sm:%s1719]
                %1729 = vst [vmem:[%s1727] sm:%s1719] %v1728
                %v1730 = vld [vmem:[%s1726 + $0x8] sm:%s1719]
                %1731 = vst [vmem:[%s1727 + $0x10] sm:%s1719] %v1730
              $region65: #{_encoder_impl.1} parent=59 // loop_footer
                %s1725 = sadd.s32 1, %s1721
              $region66: #{_encoder_impl.1} parent=59 // loop_footer_branch
                %1720 = sbr.rel target = $region62
              $region67: #{_encoder_impl.1} parent=59 // loop_exit
                _
            $region60: #{_encoder_impl.1} parent=51 // pred_fallthru
              _
          $region52: #{_encoder_impl.1} parent=47 // pred_fallthru
            _
          %1748 = vnop
        $region48: #{_encoder_impl.1} parent=39 // pred_fallthru
          _
        // Predicated region
        $region83: #{_encoder_impl.1} parent=39 // pred_check
          %p1749 = pneg %p222
        $region84: #{_encoder_impl.1} parent=39 // pred_check_branch
          %1751 = sbr.rel (%p1749) target = $region86
        $region85: #{_encoder_impl.1} parent=39 // pred_region
          _
        $region86: #{_encoder_impl.1} parent=39 // pred_fallthru
          _
      $region40: #{_encoder_impl.1} parent=5 // pred_fallthru
        _
      %p1752 = scmp.le.s32.totalorder 2, %s13
      // Predicated region
      $region87: #{_encoder_impl.1} parent=5 // pred_check
        %p1753 = pneg %p1752
      $region88: #{_encoder_impl.1} parent=5 // pred_check_branch
        %1755 = sbr.rel (%p1753) target = $region90
      $region89: #{_encoder_impl.1} parent=5 // pred_region
        %s1756 = ssub.s32 %s13, 2
        // Predicated region
        $region91: #{_encoder_impl.1} parent=89 // pred_check
          %p1757 = pneg %p202
        $region92: #{_encoder_impl.1} parent=89 // pred_check_branch
          %1759 = sbr.rel (%p1757) target = $region94
        $region93: #{_encoder_impl.1} parent=89 // pred_region
          %s1760 = sand.u32 %s187, 1
          %s1761 = sand.u32 %s187, 1
          %s1762 = smul.addr %s1761, 16
          %s1763 = scalar_lea.vmem [#allocation5], %s1762
        $region94: #{_encoder_impl.1} parent=89 // pred_fallthru
          _
        // Predicated region
        $region95: #{_encoder_impl.1} parent=89 // pred_check
          %p1764 = pneg %p228
        $region96: #{_encoder_impl.1} parent=89 // pred_check_branch
          %1766 = sbr.rel (%p1764) target = $region98
        $region97: #{_encoder_impl.1} parent=89 // pred_region
          %p1767 = scmp.lt.s32.totalorder %s24, 1
          %s1768 = scalar_select %p1767, %s24, 1
          %s1769 = smul.addr %s1768, 2
          %s1770 = scalar_lea.vmem %s6, %s1769
        $region98: #{_encoder_impl.1} parent=89 // pred_fallthru
          _
      $region90: #{_encoder_impl.1} parent=5 // pred_fallthru
        _
    $region6: #{_encoder_impl.1} parent=1 // loop_footer
      %s17 = sadd.s32 1, %s13
    $region7: #{_encoder_impl.1} parent=1 // loop_footer_branch
      %12 = sbr.rel target = $region3
    $region8: #{_encoder_impl.1} parent=1 // loop_exit
      _

</llo_original>
